<compile_context>
chip_gen: v6e
topology: v6e:2x2x1
jax: 0.10.0
libtpu: 0.0.40
codegen_flags: <defaults>
</compile_context>

<pallas_src>
import math
import functools

import jax
import jax.numpy as jnp
from jax.experimental import pallas as pl
from jax.experimental.pallas import tpu as pltpu

# ----------------------- synthetic small config -----------------------
NUM_LAYERS = 2
DIM_MODEL = 32
DIM_FF = 64
NUM_HEADS = 4
DIM_HEAD = 8
VOCAB_SIZE = 128
PROMPT_TYPES = 2
PROMPT_LENGTH = 2
SEGMENT_TYPES = 4
POS_BIAS_NUM_BUCKETS = 32
POS_BIAS_MAX_DISTANCE = 128
NORM_EPS = 1e-6
ATT_MASK_VALUE = -1e9          # config.att_mask_value
ATTN_SCALE = True
EMB_INIT_STD = 0.02
TIED = True                    # logits = input_embedding.projection(hidden)
BATCH = 2
SEQLEN = 8

# masked score positions sit near ATT_MASK_VALUE; unmasked ones are O(1-100)
_MASK_THRESH = 0.5 * ATT_MASK_VALUE


# ======================= Pallas kernels =======================

def layer_kernel(x_ref, bias_ref, ln_att_ref, wqkv_ref, wo_ref,
                 ln_ffn_ref, w0_ref, w1_ref, wout_ref, out_ref,
                 *, batch, seq, num_heads, dim_head, eps):
    """One CPM transformer block over the whole (flattened) batch.

    x_ref    : (B*S, D)      bf16 residual stream
    bias_ref : (B, H, S, S)  bf16 additive bias = pos_bias + (1-mask)*ATT_MASK_VALUE
               (the 1/sqrt(dim_head) attention scale is folded into Wq)
    weights  : bf16; matmuls accumulate in f32 on the MXU
    """
    H, Dh = num_heads, dim_head

    x = x_ref[...].astype(jnp.float32)                                 # (BS, D)

    # --- self-attention block (pre RMSNorm) ---
    var = jnp.mean(x * x, axis=-1, keepdims=True)                      # f32 stats
    xn = (x * jax.lax.rsqrt(var + eps) * ln_att_ref[...]).astype(jnp.bfloat16)

    # Fused QKV projection: one (BS, D) @ (D, 3*H*Dh) bf16 matmul, f32 acc.
    qkv = jnp.dot(xn, wqkv_ref[...], preferred_element_type=jnp.float32)  # (BS, 3HD)

    # Head-batched view (3H, BS, Dh).  At real CPM sizes Dh == 128 so these
    # lane slices are tile-aligned; at the toy size they are narrow extracts.
    qkv_h = jnp.stack(
        [qkv[:, g * Dh:(g + 1) * Dh] for g in range(3 * H)], axis=0
    ).astype(jnp.bfloat16)                                              # (3H, BS, Dh)

    att_rows = []
    for b in range(batch):                  # tiny static unroll (B=2)
        lo = b * seq
        q = qkv_h[0:H, lo:lo + seq, :]                                  # (H, S, Dh)
        k = qkv_h[H:2 * H, lo:lo + seq, :]
        v = qkv_h[2 * H:3 * H, lo:lo + seq, :]
        bias = bias_ref[b].astype(jnp.float32)                          # (H, S, S)

        # Head-batched scores / attention via rank-3 dot_generals.
        sc = jnp.einsum('hqd,hkd->hqk', q, k,
                        preferred_element_type=jnp.float32) + bias
        sc_max = jnp.max(sc, axis=-1, keepdims=True)
        e = jnp.exp(sc - sc_max)
        denom = jnp.sum(e, axis=-1, keepdims=True)                      # >= 1
        probs = e * pl.reciprocal(denom, approx=True)
        # post-softmax zeroing (torch masked_fill(..., 0)); the mask is
        # recovered from the additive bias -> no separate mask tensor DMA.
        probs = jnp.where(bias > _MASK_THRESH, probs, 0.0)
        o = jnp.einsum('hqk,hkd->hqd', probs.astype(jnp.bfloat16), v,
                       preferred_element_type=jnp.float32)              # (H, S, Dh)
        # concatenate heads in registers -> lane-dense (S, H*Dh) slab
        att_rows.append(jnp.concatenate([o[h] for h in range(H)], axis=-1))

    att = jnp.concatenate(att_rows, axis=0).astype(jnp.bfloat16)        # (BS, HD)
    # Fused attention output projection: one (BS, H*Dh) @ (H*Dh, D) matmul.
    h1 = x + jnp.dot(att, wo_ref[...], preferred_element_type=jnp.float32)

    # --- FFN block (pre RMSNorm, gated GELU) ---
    var2 = jnp.mean(h1 * h1, axis=-1, keepdims=True)
    hn = (h1 * jax.lax.rsqrt(var2 + eps) * ln_ffn_ref[...]).astype(jnp.bfloat16)
    # TODO(synk): PyTorch F.gelu is exact (erf); tanh approximation used here.
    gate = jax.nn.gelu(jnp.dot(hn, w0_ref[...], preferred_element_type=jnp.float32),
                       approximate=True)
    up = jnp.dot(hn, w1_ref[...], preferred_element_type=jnp.float32)
    ffn = jnp.dot((gate * up).astype(jnp.bfloat16), wout_ref[...],
                  preferred_element_type=jnp.float32)
    out_ref[...] = (h1 + ffn).astype(out_ref.dtype)


def final_norm_logits_kernel(x_ref, w_ln_ref, emb_ref, hid_ref, logits_ref, *, eps):
    """Fused final RMSNorm + tied logits projection over one lane-dense vocab tile."""
    x = x_ref[...].astype(jnp.float32)                                  # (N, D)
    var = jnp.mean(x * x, axis=-1, keepdims=True)
    xn = x * jax.lax.rsqrt(var + eps) * w_ln_ref[...]
    hid_ref[...] = xn                    # identical every vocab step (revisit OK)
    logits_ref[...] = jnp.dot(xn.astype(jnp.bfloat16), emb_ref[...],
                              preferred_element_type=jnp.float32)


# ======================= Pallas wrappers =======================

def transformer_layer(hidden2d, bias, p, *, batch, seq):
    """Single-invocation transformer block (all operands VMEM-resident)."""
    BS, D = hidden2d.shape
    kernel = functools.partial(layer_kernel, batch=batch, seq=seq,
                               num_heads=NUM_HEADS, dim_head=DIM_HEAD, eps=NORM_EPS)
    # At real CPM sizes this becomes a grid over (batch, seq-block, N-block)
    # marked "parallel" with the K reduction last ("arbitrary"), f32 VMEM
    # accumulators, 256-multiple tiles on v6e/v7x and explicit vmem_limit_bytes.
    return pl.pallas_call(
        kernel,
        out_shape=jax.ShapeDtypeStruct((BS, D), jnp.bfloat16),
    )(hidden2d, bias,
      p["ln_att"], p["wqkv_t"], p["wo_t"],
      p["ln_ffn"], p["w0_t"], p["w1_t"], p["wout_t"])


def final_norm_logits(hidden2d, w_ln, emb_t_bf16, *, v_tile=128):
    """Final RMSNorm fused with the tied logits projection, gridded over vocab."""
    N, D = hidden2d.shape
    V = emb_t_bf16.shape[1]
    nvt = pl.cdiv(V, v_tile)
    return pl.pallas_call(
        functools.partial(final_norm_logits_kernel, eps=NORM_EPS),
        out_shape=(jax.ShapeDtypeStruct((N, D), jnp.float32),
                   jax.ShapeDtypeStruct((N, V), jnp.float32)),
        grid=(nvt,),
        in_specs=[pl.BlockSpec((N, D), lambda j: (0, 0)),        # hidden (resident)
                  pl.BlockSpec((1, D), lambda j: (0, 0)),        # final LN weight
                  pl.BlockSpec((D, v_tile), lambda j: (0, j))],  # emb.T vocab tile
        out_specs=(pl.BlockSpec((N, D), lambda j: (0, 0)),       # normalized hidden
                   pl.BlockSpec((N, v_tile), lambda j: (0, j))), # logits tile
        compiler_params=pltpu.CompilerParams(dimension_semantics=("arbitrary",)),
    )(hidden2d, w_ln, emb_t_bf16)


# ======================= plain-JAX glue =======================

def _position_bucket(rel_pos, num_buckets, max_distance):
    # bidirectional=True branch of SegmentPositionEmbedding._position_bucket
    num_buckets //= 2
    rel_buckets = (rel_pos > 0).astype(jnp.int32) * num_buckets
    rel_pos = jnp.abs(rel_pos)
    max_exact = num_buckets // 2
    is_small = rel_pos < max_exact
    # clamp to >=1 so the dead branch of the where never produces log(0)
    rp_safe = jnp.maximum(rel_pos, 1).astype(jnp.float32)
    rp_large = max_exact + (
        jnp.log(rp_safe / max_exact)
        / math.log(max_distance / max_exact)
        * (num_buckets - max_exact)
    ).astype(jnp.int32)
    rp_large = jnp.minimum(rp_large, num_buckets - 1)
    rel_buckets = rel_buckets + jnp.where(is_small, rel_pos.astype(jnp.int32), rp_large)
    return rel_buckets


def segment_position_bias(position, segment, rel_bias_table):
    # Matches cpm-live SegmentPositionEmbedding (absolute_inner_segment=True):
    # the absolute bucket uses arange(seqlen), not the `position` tensor.
    B, S = position.shape
    key_seg = segment[:, None, :]      # (B, 1, S)
    query_seg = segment[:, :, None]    # (B, S, 1)
    bucket = query_seg * SEGMENT_TYPES + key_seg + POS_BIAS_NUM_BUCKETS  # (B, S, S)
    ar = jnp.arange(S, dtype=jnp.int32)
    abs_bucket = _position_bucket(ar[None, :] - ar[:, None],
                                  POS_BIAS_NUM_BUCKETS, POS_BIAS_MAX_DISTANCE)
    bucket = jnp.where(key_seg == query_seg, abs_bucket[None, :, :], bucket)
    embeds = jnp.take(rel_bias_table, bucket, axis=0)        # (B, S, S, H)
    return jnp.transpose(embeds, (0, 3, 1, 2)).astype(jnp.float32)  # (B, H, S, S)


def cpm_live_forward(params, input_ids, length, context, position, segment, span):
    B, S = input_ids.shape
    D, V = DIM_MODEL, VOCAB_SIZE

    # embeddings (gather glue)
    input_prompt = input_ids[:, :PROMPT_LENGTH]
    word_ids = input_ids[:, PROMPT_LENGTH:]
    prompt_states = jnp.take(params["prompt_emb"], input_prompt, axis=0)
    hidden = jnp.take(params["input_emb"], word_ids, axis=0)
    segment_states = jnp.take(params["segment_emb"], segment, axis=0)
    hidden = jnp.concatenate([prompt_states, hidden], axis=1) + segment_states

    # attention mask (reference builds it under torch.no_grad())
    ar = jnp.arange(S)
    directional = ar[None, :] <= ar[:, None]                         # (S, S)
    attention_mask = context[:, None, :] | (
        jnp.logical_not(context[:, :, None]) & directional[None, :, :])
    attention_mask = attention_mask & (span[:, None, :] == span[:, :, None])
    mask_1d = ar[None, :] < length[:, None]
    attention_mask = mask_1d[:, :, None] & mask_1d[:, None, :] & attention_mask
    mask_f = attention_mask.astype(jnp.float32)                      # (B, S, S)

    # relative/segment position bias folded with the additive mask; streamed bf16
    pos_bias = segment_position_bias(position, segment, params["rel_bias"])
    bias = (pos_bias + (1.0 - mask_f)[:, None, :, :] * ATT_MASK_VALUE
            ).astype(jnp.bfloat16)                                    # (B, H, S, S)

    # encoder (Pallas kernels); residual stream kept bf16 between layers
    hidden2d = hidden.reshape(B * S, D).astype(jnp.bfloat16)
    for lyr in params["layers"]:
        hidden2d = transformer_layer(hidden2d, bias, lyr, batch=B, seq=S)

    # fused final RMSNorm + tied output projection: logits = norm(h) @ emb.T
    hidden_out, logits2d = final_norm_logits(hidden2d, params["out_ln"], params["emb_t"])
    return logits2d.reshape(B, S, V), hidden_out.reshape(B, S, D)


# ======================= deterministic params =======================

def init_params(key):
    keys = jax.random.split(key, 4 + NUM_LAYERS)

    def normal(k, shape, std=0.02):
        return jax.random.normal(k, shape, dtype=jnp.float32) * std

    HD = NUM_HEADS * DIM_HEAD
    params = {
        "input_emb": normal(keys[0], (VOCAB_SIZE, DIM_MODEL), EMB_INIT_STD),
        "prompt_emb": normal(keys[1], (PROMPT_TYPES * PROMPT_LENGTH, DIM_MODEL), EMB_INIT_STD),
        "segment_emb": normal(keys[2], (SEGMENT_TYPES, DIM_MODEL), EMB_INIT_STD),
        "rel_bias": normal(keys[3], (SEGMENT_TYPES * SEGMENT_TYPES + POS_BIAS_NUM_BUCKETS,
                                     NUM_HEADS), EMB_INIT_STD),
        "out_ln": jnp.ones((1, DIM_MODEL), jnp.float32),
        "layers": [],
    }
    # Tied projection weight: (D, V) in bf16 for the MXU; gathers stay f32.
    params["emb_t"] = params["input_emb"].T.astype(jnp.bfloat16)

    attn_scale = (1.0 / math.sqrt(DIM_HEAD)) if ATTN_SCALE else 1.0
    for i in range(NUM_LAYERS):
        lk = jax.random.split(keys[4 + i], 7)
        # PyTorch Linear weights are (out_features, in_features)
        wq = normal(lk[0], (HD, DIM_MODEL))
        wk = normal(lk[1], (HD, DIM_MODEL))
        wv = normal(lk[2], (HD, DIM_MODEL))
        wo = normal(lk[3], (DIM_MODEL, HD))
        w0 = normal(lk[4], (DIM_FF, DIM_MODEL))
        w1 = normal(lk[5], (DIM_FF, DIM_MODEL))
        wout = normal(lk[6], (DIM_MODEL, DIM_FF))
        params["layers"].append({
            "ln_att": jnp.ones((1, DIM_MODEL), jnp.float32),
            "ln_ffn": jnp.ones((1, DIM_MODEL), jnp.float32),
            # fused QKV: columns [q | k | v]; 1/sqrt(Dh) folded into the Q columns
            "wqkv_t": jnp.concatenate([(wq * attn_scale).T, wk.T, wv.T],
                                      axis=1).astype(jnp.bfloat16),
            # (H*Dh, D): att = concat_heads(o) @ wo.T
            "wo_t": wo.T.astype(jnp.bfloat16),
            "w0_t": w0.T.astype(jnp.bfloat16),      # (D, F)
            "w1_t": w1.T.astype(jnp.bfloat16),      # (D, F)
            "wout_t": wout.T.astype(jnp.bfloat16),  # (F, D)
        })
    return params


# ======================= main =======================

if __name__ == "__main__":
    key = jax.random.PRNGKey(0)
    params_key, inputs_key = jax.random.split(key)
    params = init_params(params_key)

    k1, k2, k3 = jax.random.split(inputs_key, 3)
    prompt_ids = jax.random.randint(k1, (BATCH, PROMPT_LENGTH), 0,
                                    PROMPT_TYPES * PROMPT_LENGTH, dtype=jnp.int32)
    word_ids = jax.random.randint(k2, (BATCH, SEQLEN - PROMPT_LENGTH), 0,
                                  VOCAB_SIZE, dtype=jnp.int32)
    input_ids = jnp.concatenate([prompt_ids, word_ids], axis=1)
    length = jnp.array([SEQLEN, SEQLEN - 2], dtype=jnp.int32)
    context = jnp.arange(SEQLEN)[None, :] < jnp.array([[5], [4]])   # bool (B, S)
    position = jnp.tile(jnp.arange(SEQLEN, dtype=jnp.int32)[None, :], (BATCH, 1))
    segment = jax.random.randint(k3, (BATCH, SEQLEN), 0, SEGMENT_TYPES, dtype=jnp.int32)
    span = jnp.zeros((BATCH, SEQLEN), dtype=jnp.int32)

    fwd = jax.jit(cpm_live_forward)
    logits, hidden = fwd(params, input_ids, length, context,
                         position, segment, span)
    jax.block_until_ready((logits, hidden))
    assert logits.shape == (BATCH, SEQLEN, VOCAB_SIZE)
    assert hidden.shape == (BATCH, SEQLEN, DIM_MODEL)
    assert bool(jnp.all(jnp.isfinite(logits)))
    print("KERNEL_OK")
</pallas_src>

<mosaic_0001>
module attributes {stable_mosaic.version = 11 : i64} {
  func.func @final_norm_logits_kernel(%arg0: i32, %arg1: memref<16x32xbf16, #tpu.memory_space<vmem>>, %arg2: memref<1x32xf32, #tpu.memory_space<vmem>>, %arg3: memref<32x128xbf16, #tpu.memory_space<vmem>>, %arg4: memref<16x32xf32, #tpu.memory_space<vmem>>, %arg5: memref<16x128xf32, #tpu.memory_space<vmem>>) attributes {dimension_semantics = [#tpu.dimension_semantics<arbitrary>], iteration_bounds = array<i64: 1>, scalar_prefetch = 0 : i64, scratch_operands = 0 : i64, tpu.core_type = #tpu.core_type<tc>, window_params = [{pipeline_mode = #tpu.pipeline_mode<synchronous>, transform_indices = @transform_0, window_bounds = array<i64: 16, 32>}, {pipeline_mode = #tpu.pipeline_mode<synchronous>, transform_indices = @transform_1, window_bounds = array<i64: 1, 32>}, {transform_indices = @transform_2, window_bounds = array<i64: 32, 128>}, {pipeline_mode = #tpu.pipeline_mode<synchronous>, transform_indices = @transform_3, window_bounds = array<i64: 16, 32>}, {transform_indices = @transform_4, window_bounds = array<i64: 16, 128>}]} {
    %c0 = arith.constant 0 : index
    %c0_0 = arith.constant 0 : index
    %0 = vector.load %arg1[%c0, %c0_0] : memref<16x32xbf16, #tpu.memory_space<vmem>>, vector<16x32xbf16>
    %1 = arith.extf %0 : vector<16x32xbf16> to vector<16x32xf32>
    %2 = arith.mulf %1, %1 : vector<16x32xf32>
    %cst = arith.constant dense<0.000000e+00> : vector<16xf32>
    %3 = vector.multi_reduction <add>, %2, %cst [1] : vector<16x32xf32> to vector<16xf32>
    %4 = vector.shape_cast %3 : vector<16xf32> to vector<16x1xf32>
    %cst_1 = arith.constant 3.200000e+01 : f32
    %5 = vector.broadcast %cst_1 : f32 to vector<16x1xf32>
    %6 = arith.divf %4, %5 : vector<16x1xf32>
    %cst_2 = arith.constant 9.99999997E-7 : f32
    %7 = vector.broadcast %cst_2 : f32 to vector<16x1xf32>
    %8 = arith.addf %6, %7 : vector<16x1xf32>
    %9 = math.rsqrt %8 : vector<16x1xf32>
    %10 = vector.broadcast %9 : vector<16x1xf32> to vector<16x32xf32>
    %11 = arith.mulf %1, %10 : vector<16x32xf32>
    %c0_3 = arith.constant 0 : index
    %c0_4 = arith.constant 0 : index
    %12 = vector.load %arg2[%c0_3, %c0_4] : memref<1x32xf32, #tpu.memory_space<vmem>>, vector<1x32xf32>
    %13 = vector.broadcast %12 : vector<1x32xf32> to vector<16x32xf32>
    %14 = arith.mulf %11, %13 : vector<16x32xf32>
    %c0_5 = arith.constant 0 : index
    %c0_6 = arith.constant 0 : index
    %15 = vector.load %arg4[%c0_5, %c0_6] : memref<16x32xf32, #tpu.memory_space<vmem>>, vector<16x32xf32>
    tpu.vector_store %arg4[%c0_5, %c0_6], %14 {strides = array<i32>} : memref<16x32xf32, #tpu.memory_space<vmem>>, vector<16x32xf32>,
    %16 = arith.truncf %14 : vector<16x32xf32> to vector<16x32xbf16>
    %c0_7 = arith.constant 0 : index
    %c0_8 = arith.constant 0 : index
    %17 = vector.load %arg3[%c0_7, %c0_8] : memref<32x128xbf16, #tpu.memory_space<vmem>>, vector<32x128xbf16>
    %cst_9 = arith.constant dense<0.000000e+00> : vector<16x128xf32>
    %18 = tpu.matmul %16, %17, %cst_9 {dimension_numbers = #tpu.dot_dimension_numbers<[1], [0], [0], [1], [0, 0, 1, 1], [], []>} : vector<16x32xbf16>, vector<32x128xbf16>, vector<16x128xf32> -> vector<16x128xf32>
    %c0_10 = arith.constant 0 : index
    %c0_11 = arith.constant 0 : index
    %19 = vector.load %arg5[%c0_10, %c0_11] : memref<16x128xf32, #tpu.memory_space<vmem>>, vector<16x128xf32>
    tpu.vector_store %arg5[%c0_10, %c0_11], %18 {strides = array<i32>} : memref<16x128xf32, #tpu.memory_space<vmem>>, vector<16x128xf32>,
    return
  }
  func.func @transform_0(%arg0: i32) -> (i32, i32) {
    %c0_i32 = arith.constant 0 : i32
    %c0_i32_0 = arith.constant 0 : i32
    %c0_i32_1 = arith.constant 0 : i32
    return %c0_i32, %c0_i32_0 : i32, i32
  }
  func.func @transform_1(%arg0: i32) -> (i32, i32) {
    %c0_i32 = arith.constant 0 : i32
    %c0_i32_0 = arith.constant 0 : i32
    %c0_i32_1 = arith.constant 0 : i32
    return %c0_i32, %c0_i32_0 : i32, i32
  }
  func.func @transform_2(%arg0: i32) -> (i32, i32) {
    %c0_i32 = arith.constant 0 : i32
    %c0_i32_0 = arith.constant 0 : i32
    return %c0_i32, %arg0 : i32, i32
  }
  func.func @transform_3(%arg0: i32) -> (i32, i32) {
    %c0_i32 = arith.constant 0 : i32
    %c0_i32_0 = arith.constant 0 : i32
    %c0_i32_1 = arith.constant 0 : i32
    return %c0_i32, %c0_i32_0 : i32, i32
  }
  func.func @transform_4(%arg0: i32) -> (i32, i32) {
    %c0_i32 = arith.constant 0 : i32
    %c0_i32_0 = arith.constant 0 : i32
    return %c0_i32, %arg0 : i32, i32
  }
}

module attributes {stable_mosaic.version = 11 : i64} {
  func.func @layer_kernel(%arg0: memref<16x32xbf16, #tpu.memory_space<vmem>>, %arg1: memref<2x4x8x8xbf16, #tpu.memory_space<vmem>>, %arg2: memref<1x32xf32, #tpu.memory_space<vmem>>, %arg3: memref<32x96xbf16, #tpu.memory_space<vmem>>, %arg4: memref<32x32xbf16, #tpu.memory_space<vmem>>, %arg5: memref<1x32xf32, #tpu.memory_space<vmem>>, %arg6: memref<32x64xbf16, #tpu.memory_space<vmem>>, %arg7: memref<32x64xbf16, #tpu.memory_space<vmem>>, %arg8: memref<64x32xbf16, #tpu.memory_space<vmem>>, %arg9: memref<16x32xbf16, #tpu.memory_space<vmem>>) attributes {dimension_semantics = [], scalar_prefetch = 0 : i64, scratch_operands = 0 : i64, tpu.core_type = #tpu.core_type<tc>} {
    %c0 = arith.constant 0 : index
    %c0_0 = arith.constant 0 : index
    %0 = vector.load %arg0[%c0, %c0_0] : memref<16x32xbf16, #tpu.memory_space<vmem>>, vector<16x32xbf16>
    %1 = arith.extf %0 : vector<16x32xbf16> to vector<16x32xf32>
    %2 = arith.mulf %1, %1 : vector<16x32xf32>
    %cst = arith.constant dense<0.000000e+00> : vector<16xf32>
    %3 = vector.multi_reduction <add>, %2, %cst [1] : vector<16x32xf32> to vector<16xf32>
    %4 = vector.shape_cast %3 : vector<16xf32> to vector<16x1xf32>
    %cst_1 = arith.constant 3.200000e+01 : f32
    %5 = vector.broadcast %cst_1 : f32 to vector<16x1xf32>
    %6 = arith.divf %4, %5 : vector<16x1xf32>
    %cst_2 = arith.constant 9.99999997E-7 : f32
    %7 = vector.broadcast %cst_2 : f32 to vector<16x1xf32>
    %8 = arith.addf %6, %7 : vector<16x1xf32>
    %9 = math.rsqrt %8 : vector<16x1xf32>
    %10 = vector.broadcast %9 : vector<16x1xf32> to vector<16x32xf32>
    %11 = arith.mulf %1, %10 : vector<16x32xf32>
    %c0_3 = arith.constant 0 : index
    %c0_4 = arith.constant 0 : index
    %12 = vector.load %arg2[%c0_3, %c0_4] : memref<1x32xf32, #tpu.memory_space<vmem>>, vector<1x32xf32>
    %13 = vector.broadcast %12 : vector<1x32xf32> to vector<16x32xf32>
    %14 = arith.mulf %11, %13 : vector<16x32xf32>
    %15 = arith.truncf %14 : vector<16x32xf32> to vector<16x32xbf16>
    %c0_5 = arith.constant 0 : index
    %c0_6 = arith.constant 0 : index
    %16 = vector.load %arg3[%c0_5, %c0_6] : memref<32x96xbf16, #tpu.memory_space<vmem>>, vector<32x96xbf16>
    %cst_7 = arith.constant dense<0.000000e+00> : vector<16x96xf32>
    %17 = tpu.matmul %15, %16, %cst_7 {dimension_numbers = #tpu.dot_dimension_numbers<[1], [0], [0], [1], [0, 0, 1, 1], [], []>} : vector<16x32xbf16>, vector<32x96xbf16>, vector<16x96xf32> -> vector<16x96xf32>
    %18 = vector.extract_strided_slice %17 {offsets = [0, 0], sizes = [16, 8], strides = [1, 1]} : vector<16x96xf32> to vector<16x8xf32>
    %19 = vector.extract_strided_slice %17 {offsets = [0, 8], sizes = [16, 8], strides = [1, 1]} : vector<16x96xf32> to vector<16x8xf32>
    %20 = vector.extract_strided_slice %17 {offsets = [0, 16], sizes = [16, 8], strides = [1, 1]} : vector<16x96xf32> to vector<16x8xf32>
    %21 = vector.extract_strided_slice %17 {offsets = [0, 24], sizes = [16, 8], strides = [1, 1]} : vector<16x96xf32> to vector<16x8xf32>
    %22 = vector.extract_strided_slice %17 {offsets = [0, 32], sizes = [16, 8], strides = [1, 1]} : vector<16x96xf32> to vector<16x8xf32>
    %23 = vector.extract_strided_slice %17 {offsets = [0, 40], sizes = [16, 8], strides = [1, 1]} : vector<16x96xf32> to vector<16x8xf32>
    %24 = vector.extract_strided_slice %17 {offsets = [0, 48], sizes = [16, 8], strides = [1, 1]} : vector<16x96xf32> to vector<16x8xf32>
    %25 = vector.extract_strided_slice %17 {offsets = [0, 56], sizes = [16, 8], strides = [1, 1]} : vector<16x96xf32> to vector<16x8xf32>
    %26 = vector.extract_strided_slice %17 {offsets = [0, 64], sizes = [16, 8], strides = [1, 1]} : vector<16x96xf32> to vector<16x8xf32>
    %27 = vector.extract_strided_slice %17 {offsets = [0, 72], sizes = [16, 8], strides = [1, 1]} : vector<16x96xf32> to vector<16x8xf32>
    %28 = vector.extract_strided_slice %17 {offsets = [0, 80], sizes = [16, 8], strides = [1, 1]} : vector<16x96xf32> to vector<16x8xf32>
    %29 = vector.extract_strided_slice %17 {offsets = [0, 88], sizes = [16, 8], strides = [1, 1]} : vector<16x96xf32> to vector<16x8xf32>
    %30 = vector.shape_cast %18 : vector<16x8xf32> to vector<1x16x8xf32>
    %31 = vector.shape_cast %19 : vector<16x8xf32> to vector<1x16x8xf32>
    %32 = vector.shape_cast %20 : vector<16x8xf32> to vector<1x16x8xf32>
    %33 = vector.shape_cast %21 : vector<16x8xf32> to vector<1x16x8xf32>
    %34 = vector.shape_cast %22 : vector<16x8xf32> to vector<1x16x8xf32>
    %35 = vector.shape_cast %23 : vector<16x8xf32> to vector<1x16x8xf32>
    %36 = vector.shape_cast %24 : vector<16x8xf32> to vector<1x16x8xf32>
    %37 = vector.shape_cast %25 : vector<16x8xf32> to vector<1x16x8xf32>
    %38 = vector.shape_cast %26 : vector<16x8xf32> to vector<1x16x8xf32>
    %39 = vector.shape_cast %27 : vector<16x8xf32> to vector<1x16x8xf32>
    %40 = vector.shape_cast %28 : vector<16x8xf32> to vector<1x16x8xf32>
    %41 = vector.shape_cast %29 : vector<16x8xf32> to vector<1x16x8xf32>
    %42 = tpu.concatenate %30, %31, %32, %33, %34, %35, %36, %37, %38, %39, %40, %41 in 0 : vector<1x16x8xf32>, vector<1x16x8xf32>, vector<1x16x8xf32>, vector<1x16x8xf32>, vector<1x16x8xf32>, vector<1x16x8xf32>, vector<1x16x8xf32>, vector<1x16x8xf32>, vector<1x16x8xf32>, vector<1x16x8xf32>, vector<1x16x8xf32>, vector<1x16x8xf32> -> vector<12x16x8xf32>
    %43 = arith.truncf %42 : vector<12x16x8xf32> to vector<12x16x8xbf16>
    %44 = vector.extract_strided_slice %43 {offsets = [0, 0, 0], sizes = [4, 8, 8], strides = [1, 1, 1]} : vector<12x16x8xbf16> to vector<4x8x8xbf16>
    %45 = vector.extract_strided_slice %43 {offsets = [4, 0, 0], sizes = [4, 8, 8], strides = [1, 1, 1]} : vector<12x16x8xbf16> to vector<4x8x8xbf16>
    %46 = vector.extract_strided_slice %43 {offsets = [8, 0, 0], sizes = [4, 8, 8], strides = [1, 1, 1]} : vector<12x16x8xbf16> to vector<4x8x8xbf16>
    %c0_8 = arith.constant 0 : index
    %c0_9 = arith.constant 0 : index
    %c0_10 = arith.constant 0 : index
    %c0_11 = arith.constant 0 : index
    %47 = vector.load %arg1[%c0_8, %c0_9, %c0_10, %c0_11] : memref<2x4x8x8xbf16, #tpu.memory_space<vmem>>, vector<1x4x8x8xbf16>
    %48 = vector.shape_cast %47 : vector<1x4x8x8xbf16> to vector<4x8x8xbf16>
    %49 = arith.extf %48 : vector<4x8x8xbf16> to vector<4x8x8xf32>
    "tpu.trace_start"() <{level = 10 : i32, message = "hqd,hkd->hqk"}> : () -> ()
    %cst_12 = arith.constant dense<0.000000e+00> : vector<4x8x8xf32>
    %50 = tpu.matmul %44, %45, %cst_12 {dimension_numbers = #tpu.dot_dimension_numbers<[2], [2], [1], [1], [0, 0, 0, 1, 1, 1], [0], [0]>} : vector<4x8x8xbf16>, vector<4x8x8xbf16>, vector<4x8x8xf32> -> vector<4x8x8xf32>
    "tpu.trace_stop"() : () -> ()
    %51 = arith.addf %50, %49 : vector<4x8x8xf32>
    %cst_13 = arith.constant dense<0xFF800000> : vector<4x8xf32>
    %52 = vector.multi_reduction <maximumf>, %51, %cst_13 [2] : vector<4x8x8xf32> to vector<4x8xf32>
    %53 = vector.shape_cast %52 : vector<4x8xf32> to vector<4x8x1xf32>
    %54 = vector.broadcast %53 : vector<4x8x1xf32> to vector<4x8x8xf32>
    %55 = arith.subf %51, %54 : vector<4x8x8xf32>
    %56 = math.exp %55 : vector<4x8x8xf32>
    %cst_14 = arith.constant dense<0.000000e+00> : vector<4x8xf32>
    %57 = vector.multi_reduction <add>, %56, %cst_14 [2] : vector<4x8x8xf32> to vector<4x8xf32>
    %58 = vector.shape_cast %57 : vector<4x8xf32> to vector<4x8x1xf32>
    %59 = tpu.reciprocal %58 {approx = true} : vector<4x8x1xf32> -> vector<4x8x1xf32>
    %60 = vector.broadcast %59 : vector<4x8x1xf32> to vector<4x8x8xf32>
    %61 = arith.mulf %56, %60 : vector<4x8x8xf32>
    %cst_15 = arith.constant -5.000000e+08 : f32
    %62 = vector.broadcast %cst_15 : f32 to vector<4x8x8xf32>
    %63 = arith.cmpf ogt, %49, %62 : vector<4x8x8xf32>
    %cst_16 = arith.constant 0.000000e+00 : f32
    %64 = vector.broadcast %cst_16 : f32 to vector<4x8x8xf32>
    %65 = arith.select %63, %61, %64 : vector<4x8x8xi1>, vector<4x8x8xf32>
    %66 = arith.truncf %65 : vector<4x8x8xf32> to vector<4x8x8xbf16>
    "tpu.trace_start"() <{level = 10 : i32, message = "hqk,hkd->hqd"}> : () -> ()
    %cst_17 = arith.constant dense<0.000000e+00> : vector<4x8x8xf32>
    %67 = tpu.matmul %66, %46, %cst_17 {dimension_numbers = #tpu.dot_dimension_numbers<[2], [1], [1], [2], [0, 0, 0, 1, 1, 2], [0], [0]>} : vector<4x8x8xbf16>, vector<4x8x8xbf16>, vector<4x8x8xf32> -> vector<4x8x8xf32>
    "tpu.trace_stop"() : () -> ()
    %68 = vector.extract_strided_slice %67 {offsets = [0, 0, 0], sizes = [1, 8, 8], strides = [1, 1, 1]} : vector<4x8x8xf32> to vector<1x8x8xf32>
    %69 = vector.shape_cast %68 : vector<1x8x8xf32> to vector<8x8xf32>
    %70 = vector.extract_strided_slice %67 {offsets = [1, 0, 0], sizes = [1, 8, 8], strides = [1, 1, 1]} : vector<4x8x8xf32> to vector<1x8x8xf32>
    %71 = vector.shape_cast %70 : vector<1x8x8xf32> to vector<8x8xf32>
    %72 = vector.extract_strided_slice %67 {offsets = [2, 0, 0], sizes = [1, 8, 8], strides = [1, 1, 1]} : vector<4x8x8xf32> to vector<1x8x8xf32>
    %73 = vector.shape_cast %72 : vector<1x8x8xf32> to vector<8x8xf32>
    %74 = vector.extract_strided_slice %67 {offsets = [3, 0, 0], sizes = [1, 8, 8], strides = [1, 1, 1]} : vector<4x8x8xf32> to vector<1x8x8xf32>
    %75 = vector.shape_cast %74 : vector<1x8x8xf32> to vector<8x8xf32>
    %76 = tpu.concatenate %69, %71, %73, %75 in 1 : vector<8x8xf32>, vector<8x8xf32>, vector<8x8xf32>, vector<8x8xf32> -> vector<8x32xf32>
    %77 = vector.extract_strided_slice %43 {offsets = [0, 8, 0], sizes = [4, 8, 8], strides = [1, 1, 1]} : vector<12x16x8xbf16> to vector<4x8x8xbf16>
    %78 = vector.extract_strided_slice %43 {offsets = [4, 8, 0], sizes = [4, 8, 8], strides = [1, 1, 1]} : vector<12x16x8xbf16> to vector<4x8x8xbf16>
    %79 = vector.extract_strided_slice %43 {offsets = [8, 8, 0], sizes = [4, 8, 8], strides = [1, 1, 1]} : vector<12x16x8xbf16> to vector<4x8x8xbf16>
    %c1 = arith.constant 1 : index
    %c0_18 = arith.constant 0 : index
    %c0_19 = arith.constant 0 : index
    %c0_20 = arith.constant 0 : index
    %80 = vector.load %arg1[%c1, %c0_18, %c0_19, %c0_20] : memref<2x4x8x8xbf16, #tpu.memory_space<vmem>>, vector<1x4x8x8xbf16>
    %81 = vector.shape_cast %80 : vector<1x4x8x8xbf16> to vector<4x8x8xbf16>
    %82 = arith.extf %81 : vector<4x8x8xbf16> to vector<4x8x8xf32>
    "tpu.trace_start"() <{level = 10 : i32, message = "hqd,hkd->hqk"}> : () -> ()
    %cst_21 = arith.constant dense<0.000000e+00> : vector<4x8x8xf32>
    %83 = tpu.matmul %77, %78, %cst_21 {dimension_numbers = #tpu.dot_dimension_numbers<[2], [2], [1], [1], [0, 0, 0, 1, 1, 1], [0], [0]>} : vector<4x8x8xbf16>, vector<4x8x8xbf16>, vector<4x8x8xf32> -> vector<4x8x8xf32>
    "tpu.trace_stop"() : () -> ()
    %84 = arith.addf %83, %82 : vector<4x8x8xf32>
    %cst_22 = arith.constant dense<0xFF800000> : vector<4x8xf32>
    %85 = vector.multi_reduction <maximumf>, %84, %cst_22 [2] : vector<4x8x8xf32> to vector<4x8xf32>
    %86 = vector.shape_cast %85 : vector<4x8xf32> to vector<4x8x1xf32>
    %87 = vector.broadcast %86 : vector<4x8x1xf32> to vector<4x8x8xf32>
    %88 = arith.subf %84, %87 : vector<4x8x8xf32>
    %89 = math.exp %88 : vector<4x8x8xf32>
    %cst_23 = arith.constant dense<0.000000e+00> : vector<4x8xf32>
    %90 = vector.multi_reduction <add>, %89, %cst_23 [2] : vector<4x8x8xf32> to vector<4x8xf32>
    %91 = vector.shape_cast %90 : vector<4x8xf32> to vector<4x8x1xf32>
    %92 = tpu.reciprocal %91 {approx = true} : vector<4x8x1xf32> -> vector<4x8x1xf32>
    %93 = vector.broadcast %92 : vector<4x8x1xf32> to vector<4x8x8xf32>
    %94 = arith.mulf %89, %93 : vector<4x8x8xf32>
    %cst_24 = arith.constant -5.000000e+08 : f32
    %95 = vector.broadcast %cst_24 : f32 to vector<4x8x8xf32>
    %96 = arith.cmpf ogt, %82, %95 : vector<4x8x8xf32>
    %cst_25 = arith.constant 0.000000e+00 : f32
    %97 = vector.broadcast %cst_25 : f32 to vector<4x8x8xf32>
    %98 = arith.select %96, %94, %97 : vector<4x8x8xi1>, vector<4x8x8xf32>
    %99 = arith.truncf %98 : vector<4x8x8xf32> to vector<4x8x8xbf16>
    "tpu.trace_start"() <{level = 10 : i32, message = "hqk,hkd->hqd"}> : () -> ()
    %cst_26 = arith.constant dense<0.000000e+00> : vector<4x8x8xf32>
    %100 = tpu.matmul %99, %79, %cst_26 {dimension_numbers = #tpu.dot_dimension_numbers<[2], [1], [1], [2], [0, 0, 0, 1, 1, 2], [0], [0]>} : vector<4x8x8xbf16>, vector<4x8x8xbf16>, vector<4x8x8xf32> -> vector<4x8x8xf32>
    "tpu.trace_stop"() : () -> ()
    %101 = vector.extract_strided_slice %100 {offsets = [0, 0, 0], sizes = [1, 8, 8], strides = [1, 1, 1]} : vector<4x8x8xf32> to vector<1x8x8xf32>
    %102 = vector.shape_cast %101 : vector<1x8x8xf32> to vector<8x8xf32>
    %103 = vector.extract_strided_slice %100 {offsets = [1, 0, 0], sizes = [1, 8, 8], strides = [1, 1, 1]} : vector<4x8x8xf32> to vector<1x8x8xf32>
    %104 = vector.shape_cast %103 : vector<1x8x8xf32> to vector<8x8xf32>
    %105 = vector.extract_strided_slice %100 {offsets = [2, 0, 0], sizes = [1, 8, 8], strides = [1, 1, 1]} : vector<4x8x8xf32> to vector<1x8x8xf32>
    %106 = vector.shape_cast %105 : vector<1x8x8xf32> to vector<8x8xf32>
    %107 = vector.extract_strided_slice %100 {offsets = [3, 0, 0], sizes = [1, 8, 8], strides = [1, 1, 1]} : vector<4x8x8xf32> to vector<1x8x8xf32>
    %108 = vector.shape_cast %107 : vector<1x8x8xf32> to vector<8x8xf32>
    %109 = tpu.concatenate %102, %104, %106, %108 in 1 : vector<8x8xf32>, vector<8x8xf32>, vector<8x8xf32>, vector<8x8xf32> -> vector<8x32xf32>
    %110 = tpu.concatenate %76, %109 in 0 : vector<8x32xf32>, vector<8x32xf32> -> vector<16x32xf32>
    %111 = arith.truncf %110 : vector<16x32xf32> to vector<16x32xbf16>
    %c0_27 = arith.constant 0 : index
    %c0_28 = arith.constant 0 : index
    %112 = vector.load %arg4[%c0_27, %c0_28] : memref<32x32xbf16, #tpu.memory_space<vmem>>, vector<32x32xbf16>
    %cst_29 = arith.constant dense<0.000000e+00> : vector<16x32xf32>
    %113 = tpu.matmul %111, %112, %cst_29 {dimension_numbers = #tpu.dot_dimension_numbers<[1], [0], [0], [1], [0, 0, 1, 1], [], []>} : vector<16x32xbf16>, vector<32x32xbf16>, vector<16x32xf32> -> vector<16x32xf32>
    %114 = arith.addf %1, %113 : vector<16x32xf32>
    %115 = arith.mulf %114, %114 : vector<16x32xf32>
    %cst_30 = arith.constant dense<0.000000e+00> : vector<16xf32>
    %116 = vector.multi_reduction <add>, %115, %cst_30 [1] : vector<16x32xf32> to vector<16xf32>
    %117 = vector.shape_cast %116 : vector<16xf32> to vector<16x1xf32>
    %cst_31 = arith.constant 3.200000e+01 : f32
    %118 = vector.broadcast %cst_31 : f32 to vector<16x1xf32>
    %119 = arith.divf %117, %118 : vector<16x1xf32>
    %cst_32 = arith.constant 9.99999997E-7 : f32
    %120 = vector.broadcast %cst_32 : f32 to vector<16x1xf32>
    %121 = arith.addf %119, %120 : vector<16x1xf32>
    %122 = math.rsqrt %121 : vector<16x1xf32>
    %123 = vector.broadcast %122 : vector<16x1xf32> to vector<16x32xf32>
    %124 = arith.mulf %114, %123 : vector<16x32xf32>
    %c0_33 = arith.constant 0 : index
    %c0_34 = arith.constant 0 : index
    %125 = vector.load %arg5[%c0_33, %c0_34] : memref<1x32xf32, #tpu.memory_space<vmem>>, vector<1x32xf32>
    %126 = vector.broadcast %125 : vector<1x32xf32> to vector<16x32xf32>
    %127 = arith.mulf %124, %126 : vector<16x32xf32>
    %128 = arith.truncf %127 : vector<16x32xf32> to vector<16x32xbf16>
    %c0_35 = arith.constant 0 : index
    %c0_36 = arith.constant 0 : index
    %129 = vector.load %arg6[%c0_35, %c0_36] : memref<32x64xbf16, #tpu.memory_space<vmem>>, vector<32x64xbf16>
    %cst_37 = arith.constant dense<0.000000e+00> : vector<16x64xf32>
    %130 = tpu.matmul %128, %129, %cst_37 {dimension_numbers = #tpu.dot_dimension_numbers<[1], [0], [0], [1], [0, 0, 1, 1], [], []>} : vector<16x32xbf16>, vector<32x64xbf16>, vector<16x64xf32> -> vector<16x64xf32>
    %131 = arith.mulf %130, %130 : vector<16x64xf32>
    %132 = arith.mulf %130, %131 : vector<16x64xf32>
    %cst_38 = arith.constant 4.471500e-02 : f32
    %133 = vector.broadcast %cst_38 : f32 to vector<16x64xf32>
    %134 = arith.mulf %133, %132 : vector<16x64xf32>
    %135 = arith.addf %130, %134 : vector<16x64xf32>
    %cst_39 = arith.constant 0.797884583 : f32
    %136 = vector.broadcast %cst_39 : f32 to vector<16x64xf32>
    %137 = arith.mulf %136, %135 : vector<16x64xf32>
    %138 = math.tanh %137 : vector<16x64xf32>
    %cst_40 = arith.constant 1.000000e+00 : f32
    %139 = vector.broadcast %cst_40 : f32 to vector<16x64xf32>
    %140 = arith.addf %139, %138 : vector<16x64xf32>
    %cst_41 = arith.constant 5.000000e-01 : f32
    %141 = vector.broadcast %cst_41 : f32 to vector<16x64xf32>
    %142 = arith.mulf %141, %140 : vector<16x64xf32>
    %143 = arith.mulf %130, %142 : vector<16x64xf32>
    %c0_42 = arith.constant 0 : index
    %c0_43 = arith.constant 0 : index
    %144 = vector.load %arg7[%c0_42, %c0_43] : memref<32x64xbf16, #tpu.memory_space<vmem>>, vector<32x64xbf16>
    %cst_44 = arith.constant dense<0.000000e+00> : vector<16x64xf32>
    %145 = tpu.matmul %128, %144, %cst_44 {dimension_numbers = #tpu.dot_dimension_numbers<[1], [0], [0], [1], [0, 0, 1, 1], [], []>} : vector<16x32xbf16>, vector<32x64xbf16>, vector<16x64xf32> -> vector<16x64xf32>
    %146 = arith.mulf %143, %145 : vector<16x64xf32>
    %147 = arith.truncf %146 : vector<16x64xf32> to vector<16x64xbf16>
    %c0_45 = arith.constant 0 : index
    %c0_46 = arith.constant 0 : index
    %148 = vector.load %arg8[%c0_45, %c0_46] : memref<64x32xbf16, #tpu.memory_space<vmem>>, vector<64x32xbf16>
    %cst_47 = arith.constant dense<0.000000e+00> : vector<16x32xf32>
    %149 = tpu.matmul %147, %148, %cst_47 {dimension_numbers = #tpu.dot_dimension_numbers<[1], [0], [0], [1], [0, 0, 1, 1], [], []>} : vector<16x64xbf16>, vector<64x32xbf16>, vector<16x32xf32> -> vector<16x32xf32>
    %150 = arith.addf %114, %149 : vector<16x32xf32>
    %151 = arith.truncf %150 : vector<16x32xf32> to vector<16x32xbf16>
    %c0_48 = arith.constant 0 : index
    %c0_49 = arith.constant 0 : index
    %152 = vector.load %arg9[%c0_48, %c0_49] : memref<16x32xbf16, #tpu.memory_space<vmem>>, vector<16x32xbf16>
    tpu.vector_store %arg9[%c0_48, %c0_49], %151 {strides = array<i32>} : memref<16x32xbf16, #tpu.memory_space<vmem>>, vector<16x32xbf16>,
    return
  }
}

</mosaic_0001>

<llo_original>
// kernel: cpm_live_forward.5
$region0: #{cpm_live_forward.5}
  #allocation0 [shape = 'u32[]', space=smem, size = 0x4, offset = 0x4, fixed_abs, tag = 'smem constant byte address 0x4 - core index']
  #allocation1 [shape = 'u32[144,128]{1,0:T(1,128)}', space=vmem, size = 0x12000, scoped, tag = 'internal scratch']
  %s0 = inlined_call_operand.vmem [shape: bf16[16,32], index: 0, kind: input, shape index: {}]
  %s1 = inlined_call_operand.vmem [shape: f32[1,32], index: 1, kind: input, shape index: {}]
  %s2 = inlined_call_operand.vmem [shape: bf16[32,128], index: 2, kind: input, shape index: {}]
  %s3 = inlined_call_operand.hbm [shape: f32[16,32], index: 3, kind: output, shape index: {0}]
  %s4 = inlined_call_operand.hbm [shape: f32[16,128], index: 4, kind: output, shape index: {1}]
  %5 = xla_tuple %s3, %s4
  %s6 = sld [smem:[#allocation0]]
  $region30: #{cpm_live_forward.5} parent=0
    _
  %s8 = ssub.s32 1, %s6
  %s9 = scalar_select 0, %s8, %s6
  $region1: #{cpm_live_forward.5} parent=0
    #allocation2 [shape = 'u8[8192]{0}', space=vmem, size = 0x2000, scoped, tag = 'output window, operand 0, single buffered']
    #allocation3 [shape = 's32[1]{0}', space=sflag, size = 0x4, scoped, tag = 'scoped memory for cpm_live_forward.5']
    #allocation4 [shape = 'u8[8192]{0}', space=vmem, size = 0x2000, scoped, tag = 'output window, operand 1, single buffered']
    #allocation5 [shape = 's32[1]{0}', space=sflag, size = 0x4, scoped, tag = 'scoped memory for cpm_live_forward.5']
    %10 = vsyncpa [#allocation3], 0
    %11 = vsyncpa [#allocation5], 0
    // Predicated region
    $region2: #{cpm_live_forward.5} parent=1 // pred_check
      _
    $region3: #{cpm_live_forward.5} parent=1 // pred_check_branch
      %13 = sbr.rel (0) target = $region5
    $region4: #{cpm_live_forward.5} parent=1 // pred_region
      _
    $region5: #{cpm_live_forward.5} parent=1 // pred_fallthru
      _
    // Predicated region
    $region6: #{cpm_live_forward.5} parent=1 // pred_check
      _
    $region7: #{cpm_live_forward.5} parent=1 // pred_check_branch
      %15 = sbr.rel (0) target = $region9
    $region8: #{cpm_live_forward.5} parent=1 // pred_region
      _
    $region9: #{cpm_live_forward.5} parent=1 // pred_fallthru
      _
    // Predicated region
    $region10: #{cpm_live_forward.5} parent=1 // pred_check
      _
    $region11: #{cpm_live_forward.5} parent=1 // pred_check_branch
      %17 = sbr.rel (0) target = $region13
    $region12: #{cpm_live_forward.5} parent=1 // pred_region
      _
    $region13: #{cpm_live_forward.5} parent=1 // pred_fallthru
      _
    %v19 = vld [vmem:[%s0] sm:$0xf]
    %v20 = vld [vmem:[%s0 + $0x4] sm:$0xf]
    %v21 = vunpack.c.l.bf16 %v19
    %v22 = vunpack.c.l.bf16 %v20
    %v23 = vmul.f32 %v21, %v21
    %v24 = vmul.f32 %v22, %v22
    %vm25 = vcmask 261120
    %v26 = vsel %vm25, %v23, 0.0
    %27 = vadd.xlane.f32.xlu0 %v26
    %v28 = vpop.xlane.xlu0 %27
    %v29 = vsel %vm25, %v24, 0.0
    %30 = vadd.xlane.f32.xlu0 %v29
    %v31 = vpop.xlane.xlu0 %30
    %v32 = vrcp.pop 32.0
    %v33 = vmul.f32 %v28, %v32
    %v34 = vmul.f32 %v31, %v32
    %v35 = vadd.f32 %v33, 1e-06
    %v36 = vadd.f32 %v34, 1e-06
    %v37 = vrsqrt.pop %v35
    %v38 = vrsqrt.pop %v36
    %v39 = vmul.f32 %v21, %v37
    %v40 = vmul.f32 %v22, %v38
    %v41 = vld [vmem:[%s1] sm:$0x1]
    %v43 = vlaneseq
    %v44 = vshrl.u32 %v43, 7
    %v45 = vsub.s32 0, %v44
    %v46 = vrot.slane %v41, %v45
    %v48 = vmul.f32 %v39, %v46
    %v49 = vmul.f32 %v40, %v46
    %50 = vst.msk [vmem:[#allocation2] sm:$0xff] %vm25, %v48
    %51 = vst.msk [vmem:[#allocation2 + $0x8] sm:$0xff] %vm25, %v49
    %v52 = vpack.c.bf16 %v49, %v48
    %v53 = vld [vmem:[%s2] sm:$0xf]
    %v54 = vld [vmem:[%s2 + $0x4] sm:$0xf]
    %v55 = vld [vmem:[%s2 + $0x8] sm:$0xf]
    %v56 = vld [vmem:[%s2 + $0xc] sm:$0xf]
    %v61 = vunpack.c.l.b16 %v53
    %v62 = vunpack.c.l.b16 %v54
    %v63 = vunpack.c.l.b16 %v55
    %v64 = vunpack.c.l.b16 %v56
    %v65 = vpack.c.b16 %v62, %v61
    %v66 = vpack.c.b16 %v64, %v63
    %v70 = vsel %vm25, %v52, 0
    %72 = vmatprep.subr.bf16.mxu0 0
    %73 = vmatpush1.bf16.msra.mxu0 0
    %74 = vmatprep.subr.bf16.mxu0 0
    %75 = vmatpush1.bf16.msra.mxu0 0
    %76 = vmatprep.subr.bf16.mxu0 0
    %77 = vmatpush1.bf16.msra.mxu0 0
    %78 = vmatprep.subr.bf16.mxu0 0
    %79 = vmatpush1.bf16.msra.mxu0 0
    %80 = vmatprep.subr.bf16.mxu0 0
    %81 = vmatpush1.bf16.msra.mxu0 0
    %82 = vmatprep.subr.bf16.mxu0 0
    %83 = vmatpush1.bf16.msra.mxu0 0
    %84 = vmatprep.subr.bf16.mxu0 0
    %85 = vmatpush1.bf16.msra.mxu0 %v66
    %86 = vmatprep.subr.bf16.mxu0 0
    %87 = vmatpush1.bf16.msra.mxu0 %v65
    %88 = vmatprep.subr.bf16.mxu0 0
    %89 = vmatpush2.bf16.msra.mxu0 0
    %90 = vmatprep.subr.bf16.mxu0 0
    %91 = vmatpush2.bf16.msra.mxu0 0
    %92 = vmatprep.subr.bf16.mxu0 0
    %93 = vmatpush2.bf16.msra.mxu0 0
    %94 = vmatprep.subr.bf16.mxu0 0
    %95 = vmatpush2.bf16.msra.mxu0 0
    %96 = vmatprep.subr.bf16.mxu0 0
    %97 = vmatpush2.bf16.msra.mxu0 0
    %98 = vmatprep.subr.bf16.mxu0 0
    %99 = vmatpush2.bf16.msra.mxu0 0
    %100 = vmatprep.subr.bf16.mxu0 0
    %101 = vmatpush2.bf16.msra.mxu0 0
    %102 = vmatprep.subr.bf16.mxu0 0
    %103 = vmatpush2.bf16.msra.mxu0 0
    %104 = vmatprep.mubr.bf16.mxu0 0
    %105 = vmatmul.mubr.bf16.gmra.mxu0 %v70
    %v106 = vpop.f32.mrf.mxu0
    %v107 = vadd.f32 0.0, %v106
    %v108 = vpop.f32.mrf.mxu0
    %v109 = vpop.f32.mrf.mxu0
    %v110 = vadd.f32 0.0, %v109
    %v111 = vpop.f32.mrf.mxu0
    %112 = vdwg.mxu0
    %113 = vst [vmem:[#allocation4] sm:$0xff] %v107
    %114 = vst [vmem:[#allocation4 + $0x8] sm:$0xff] %v110
    // Predicated region
    $region14: #{cpm_live_forward.5} parent=1 // pred_check
      _
    $region15: #{cpm_live_forward.5} parent=1 // pred_check_branch
      %116 = sbr.rel (0) target = $region17
    $region16: #{cpm_live_forward.5} parent=1 // pred_region
      %s118 = ssub.s32 256, 256
      %119 = vsyncadd [#allocation3], %s118
      %s120 = sshll.u32 [#allocation2], 4
      %s121 = int_to_ptr.vmem [resolvable:$true] %s120
      %126 = dma.vmem_to_hbm [thread:$0]  %s121, 256, %s3, [#allocation3], 128, 128, 8
    $region17: #{cpm_live_forward.5} parent=1 // pred_fallthru
      _
    // Predicated region
    $region18: #{cpm_live_forward.5} parent=1 // pred_check
      _
    $region19: #{cpm_live_forward.5} parent=1 // pred_check_branch
      %128 = sbr.rel (0) target = $region21
    $region20: #{cpm_live_forward.5} parent=1 // pred_region
      %s130 = ssub.s32 256, 256
      %131 = vsyncadd [#allocation5], %s130
      %s132 = sshll.u32 [#allocation4], 4
      %s133 = int_to_ptr.vmem [resolvable:$true] %s132
      %138 = dma.vmem_to_hbm [thread:$0]  %s133, 256, %s4, [#allocation5], 128, 128, 8
    $region21: #{cpm_live_forward.5} parent=1 // pred_fallthru
      _
    // Predicated region
    $region22: #{cpm_live_forward.5} parent=1 // pred_check
      _
    $region23: #{cpm_live_forward.5} parent=1 // pred_check_branch
      %140 = sbr.rel (0) target = $region25
    $region24: #{cpm_live_forward.5} parent=1 // pred_region
      %141 = dma.done [#allocation3], 256
    $region25: #{cpm_live_forward.5} parent=1 // pred_fallthru
      _
    // Predicated region
    $region26: #{cpm_live_forward.5} parent=1 // pred_check
      _
    $region27: #{cpm_live_forward.5} parent=1 // pred_check_branch
      %143 = sbr.rel (0) target = $region29
    $region28: #{cpm_live_forward.5} parent=1 // pred_region
      %144 = dma.done [#allocation5], 256
    $region29: #{cpm_live_forward.5} parent=1 // pred_fallthru
      _
    %145 = vsyncpa [#allocation3], 1
    %146 = vsyncpa [#allocation5], 1

// kernel: cpm_live_forward.3
$region0: #{cpm_live_forward.3}
  #allocation0 [shape = 'u32[]', space=smem, size = 0x4, offset = 0x4, fixed_abs, tag = 'smem constant byte address 0x4 - core index']
  #allocation1 [shape = 'u32[144,128]{1,0:T(1,128)}', space=vmem, size = 0x12000, scoped, tag = 'internal scratch']
  %s0 = inlined_call_operand.vmem [shape: bf16[16,32], index: 0, kind: input, shape index: {}]
  %s1 = inlined_call_operand.vmem [shape: bf16[2,4,8,8], index: 1, kind: input, shape index: {}]
  %s2 = inlined_call_operand.vmem [shape: f32[1,32], index: 2, kind: input, shape index: {}]
  %s3 = inlined_call_operand.vmem [shape: bf16[32,96], index: 3, kind: input, shape index: {}]
  %s4 = inlined_call_operand.vmem [shape: bf16[32,32], index: 4, kind: input, shape index: {}]
  %s5 = inlined_call_operand.vmem [shape: f32[1,32], index: 5, kind: input, shape index: {}]
  %s6 = inlined_call_operand.vmem [shape: bf16[32,64], index: 6, kind: input, shape index: {}]
  %s7 = inlined_call_operand.vmem [shape: bf16[32,64], index: 7, kind: input, shape index: {}]
  %s8 = inlined_call_operand.vmem [shape: bf16[64,32], index: 8, kind: input, shape index: {}]
  %s9 = inlined_call_operand.vmem [shape: bf16[16,32], index: 9, kind: output, shape index: {}]
  %s10 = sld [smem:[#allocation0]]
  $region46: #{cpm_live_forward.3} parent=0
    _
  %s12 = ssub.s32 1, %s10
  %s13 = scalar_select 0, %s12, %s10
  // Predicated region
  $region2: #{cpm_live_forward.3} parent=0 // pred_check
    _
  $region3: #{cpm_live_forward.3} parent=0 // pred_check_branch
    %15 = sbr.rel (0) target = $region5
  $region4: #{cpm_live_forward.3} parent=0 // pred_region
    _
  $region5: #{cpm_live_forward.3} parent=0 // pred_fallthru
    _
  // Predicated region
  $region6: #{cpm_live_forward.3} parent=0 // pred_check
    _
  $region7: #{cpm_live_forward.3} parent=0 // pred_check_branch
    %17 = sbr.rel (0) target = $region9
  $region8: #{cpm_live_forward.3} parent=0 // pred_region
    _
  $region9: #{cpm_live_forward.3} parent=0 // pred_fallthru
    _
  // Predicated region
  $region10: #{cpm_live_forward.3} parent=0 // pred_check
    _
  $region11: #{cpm_live_forward.3} parent=0 // pred_check_branch
    %19 = sbr.rel (0) target = $region13
  $region12: #{cpm_live_forward.3} parent=0 // pred_region
    _
  $region13: #{cpm_live_forward.3} parent=0 // pred_fallthru
    _
  // Predicated region
  $region14: #{cpm_live_forward.3} parent=0 // pred_check
    _
  $region15: #{cpm_live_forward.3} parent=0 // pred_check_branch
    %21 = sbr.rel (0) target = $region17
  $region16: #{cpm_live_forward.3} parent=0 // pred_region
    _
  $region17: #{cpm_live_forward.3} parent=0 // pred_fallthru
    _
  // Predicated region
  $region18: #{cpm_live_forward.3} parent=0 // pred_check
    _
  $region19: #{cpm_live_forward.3} parent=0 // pred_check_branch
    %23 = sbr.rel (0) target = $region21
  $region20: #{cpm_live_forward.3} parent=0 // pred_region
    _
  $region21: #{cpm_live_forward.3} parent=0 // pred_fallthru
    _
  // Predicated region
  $region22: #{cpm_live_forward.3} parent=0 // pred_check
    _
  $region23: #{cpm_live_forward.3} parent=0 // pred_check_branch
    %25 = sbr.rel (0) target = $region25
  $region24: #{cpm_live_forward.3} parent=0 // pred_region
    _
  $region25: #{cpm_live_forward.3} parent=0 // pred_fallthru
    _
  // Predicated region
  $region26: #{cpm_live_forward.3} parent=0 // pred_check
    _
  $region27: #{cpm_live_forward.3} parent=0 // pred_check_branch
    %27 = sbr.rel (0) target = $region29
  $region28: #{cpm_live_forward.3} parent=0 // pred_region
    _
  $region29: #{cpm_live_forward.3} parent=0 // pred_fallthru
    _
  // Predicated region
  $region30: #{cpm_live_forward.3} parent=0 // pred_check
    _
  $region31: #{cpm_live_forward.3} parent=0 // pred_check_branch
    %29 = sbr.rel (0) target = $region33
  $region32: #{cpm_live_forward.3} parent=0 // pred_region
    _
  $region33: #{cpm_live_forward.3} parent=0 // pred_fallthru
    _
  // Predicated region
  $region34: #{cpm_live_forward.3} parent=0 // pred_check
    _
  $region35: #{cpm_live_forward.3} parent=0 // pred_check_branch
    %31 = sbr.rel (0) target = $region37
  $region36: #{cpm_live_forward.3} parent=0 // pred_region
    _
  $region37: #{cpm_live_forward.3} parent=0 // pred_fallthru
    _
  %v33 = vld [vmem:[%s0] sm:$0xf]
  %v34 = vld [vmem:[%s0 + $0x4] sm:$0xf]
  %v35 = vunpack.c.l.bf16 %v33
  %v36 = vunpack.c.l.bf16 %v34
  %v37 = vmul.f32 %v35, %v35
  %v38 = vmul.f32 %v36, %v36
  %vm39 = vcmask 261120
  %v40 = vsel %vm39, %v37, 0.0
  %41 = vadd.xlane.f32.xlu0 %v40
  %v42 = vpop.xlane.xlu0 %41
  %v43 = vsel %vm39, %v38, 0.0
  %44 = vadd.xlane.f32.xlu0 %v43
  %v45 = vpop.xlane.xlu0 %44
  %v46 = vrcp.pop 32.0
  %v47 = vmul.f32 %v42, %v46
  %v48 = vmul.f32 %v45, %v46
  %v49 = vadd.f32 %v47, 1e-06
  %v50 = vadd.f32 %v48, 1e-06
  %v51 = vrsqrt.pop %v49
  %v52 = vrsqrt.pop %v50
  %v53 = vmul.f32 %v35, %v51
  %v54 = vmul.f32 %v36, %v52
  %v55 = vld [vmem:[%s2] sm:$0x1]
  %v57 = vlaneseq
  %v58 = vshrl.u32 %v57, 7
  %v59 = vsub.s32 0, %v58
  %v60 = vrot.slane %v55, %v59
  %v62 = vmul.f32 %v53, %v60
  %v63 = vmul.f32 %v54, %v60
  %v64 = vpack.c.bf16 %v63, %v62
  %v65 = vld [vmem:[%s3] sm:$0xf]
  %v66 = vld [vmem:[%s3 + $0x4] sm:$0xf]
  %v67 = vld [vmem:[%s3 + $0x8] sm:$0xf]
  %v68 = vld [vmem:[%s3 + $0xc] sm:$0xf]
  %v73 = vunpack.c.l.b16 %v65
  %v74 = vunpack.c.l.b16 %v66
  %v75 = vunpack.c.l.b16 %v67
  %v76 = vunpack.c.l.b16 %v68
  %v77 = vpack.c.b16 %v74, %v73
  %v78 = vpack.c.b16 %v76, %v75
  %v82 = vsel %vm39, %v64, 0
  %84 = vmatprep.subr.bf16.mxu0 0
  %85 = vmatpush1.bf16.msra.mxu0 0
  %86 = vmatprep.subr.bf16.mxu0 0
  %87 = vmatpush1.bf16.msra.mxu0 0
  %88 = vmatprep.subr.bf16.mxu0 0
  %89 = vmatpush1.bf16.msra.mxu0 0
  %90 = vmatprep.subr.bf16.mxu0 0
  %91 = vmatpush1.bf16.msra.mxu0 0
  %92 = vmatprep.subr.bf16.mxu0 0
  %93 = vmatpush1.bf16.msra.mxu0 0
  %94 = vmatprep.subr.bf16.mxu0 0
  %95 = vmatpush1.bf16.msra.mxu0 0
  %96 = vmatprep.subr.bf16.mxu0 0
  %97 = vmatpush1.bf16.msra.mxu0 %v78
  %98 = vmatprep.subr.bf16.mxu0 0
  %99 = vmatpush1.bf16.msra.mxu0 %v77
  %100 = vmatprep.subr.bf16.mxu0 0
  %101 = vmatpush2.bf16.msra.mxu0 0
  %102 = vmatprep.subr.bf16.mxu0 0
  %103 = vmatpush2.bf16.msra.mxu0 0
  %104 = vmatprep.subr.bf16.mxu0 0
  %105 = vmatpush2.bf16.msra.mxu0 0
  %106 = vmatprep.subr.bf16.mxu0 0
  %107 = vmatpush2.bf16.msra.mxu0 0
  %108 = vmatprep.subr.bf16.mxu0 0
  %109 = vmatpush2.bf16.msra.mxu0 0
  %110 = vmatprep.subr.bf16.mxu0 0
  %111 = vmatpush2.bf16.msra.mxu0 0
  %112 = vmatprep.subr.bf16.mxu0 0
  %113 = vmatpush2.bf16.msra.mxu0 0
  %114 = vmatprep.subr.bf16.mxu0 0
  %115 = vmatpush2.bf16.msra.mxu0 0
  %116 = vmatprep.mubr.bf16.mxu0 0
  %117 = vmatmul.mubr.bf16.gmra.mxu0 %v82
  %v118 = vpop.f32.mrf.mxu0
  %v119 = vadd.f32 0.0, %v118
  %v120 = vpop.f32.mrf.mxu0
  %v121 = vpop.f32.mrf.mxu0
  %v122 = vadd.f32 0.0, %v121
  %v123 = vpop.f32.mrf.mxu0
  %124 = vdwg.mxu0
  %127 = vrot.lane.b32.xlu0 %v119, 120
  %v128 = vpop.permute.xlu0 %127
  %129 = vrot.lane.b32.xlu0 %v122, 120
  %v130 = vpop.permute.xlu0 %129
  %133 = vrot.lane.b32.xlu0 %v119, 112
  %v134 = vpop.permute.xlu0 %133
  %135 = vrot.lane.b32.xlu0 %v122, 112
  %v136 = vpop.permute.xlu0 %135
  %139 = vrot.lane.b32.xlu0 %v119, 104
  %v140 = vpop.permute.xlu0 %139
  %141 = vrot.lane.b32.xlu0 %v122, 104
  %v142 = vpop.permute.xlu0 %141
  %145 = vrot.lane.b32.xlu0 %v119, 96
  %v146 = vpop.permute.xlu0 %145
  %147 = vrot.lane.b32.xlu0 %v122, 96
  %v148 = vpop.permute.xlu0 %147
  %151 = vrot.lane.b32.xlu0 %v119, 88
  %v152 = vpop.permute.xlu0 %151
  %153 = vrot.lane.b32.xlu0 %v122, 88
  %v154 = vpop.permute.xlu0 %153
  %157 = vrot.lane.b32.xlu0 %v119, 80
  %v158 = vpop.permute.xlu0 %157
  %159 = vrot.lane.b32.xlu0 %v122, 80
  %v160 = vpop.permute.xlu0 %159
  %163 = vrot.lane.b32.xlu0 %v119, 72
  %v164 = vpop.permute.xlu0 %163
  %165 = vrot.lane.b32.xlu0 %v122, 72
  %v166 = vpop.permute.xlu0 %165
  %169 = vrot.lane.b32.xlu0 %v119, 64
  %v170 = vpop.permute.xlu0 %169
  %171 = vrot.lane.b32.xlu0 %v122, 64
  %v172 = vpop.permute.xlu0 %171
  %175 = vrot.lane.b32.xlu0 %v119, 56
  %v176 = vpop.permute.xlu0 %175
  %177 = vrot.lane.b32.xlu0 %v122, 56
  %v178 = vpop.permute.xlu0 %177
  %181 = vrot.lane.b32.xlu0 %v119, 48
  %v182 = vpop.permute.xlu0 %181
  %183 = vrot.lane.b32.xlu0 %v122, 48
  %v184 = vpop.permute.xlu0 %183
  %187 = vrot.lane.b32.xlu0 %v119, 40
  %v188 = vpop.permute.xlu0 %187
  %189 = vrot.lane.b32.xlu0 %v122, 40
  %v190 = vpop.permute.xlu0 %189
  %v193 = vpack.c.bf16 %v122, %v119
  %v194 = vpack.c.bf16 %v130, %v128
  %v195 = vpack.c.bf16 %v136, %v134
  %v196 = vpack.c.bf16 %v142, %v140
  %v197 = vpack.c.bf16 %v148, %v146
  %v198 = vpack.c.bf16 %v154, %v152
  %v199 = vpack.c.bf16 %v160, %v158
  %v200 = vpack.c.bf16 %v166, %v164
  %v201 = vpack.c.bf16 %v172, %v170
  %v202 = vpack.c.bf16 %v178, %v176
  %v203 = vpack.c.bf16 %v184, %v182
  %v204 = vpack.c.bf16 %v190, %v188
  %v205 = vld [vmem:[%s1] sm:$0xf]
  %v206 = vld [vmem:[%s1 + $0x4] sm:$0xf]
  %v207 = vld [vmem:[%s1 + $0x8] sm:$0xf]
  %v208 = vld [vmem:[%s1 + $0xc] sm:$0xf]
  %v209 = vunpack.c.l.bf16 %v205
  %v210 = vunpack.c.l.bf16 %v206
  %v211 = vunpack.c.l.bf16 %v207
  %v212 = vunpack.c.l.bf16 %v208
  %vm213 = vcmask 64512
  %v215 = vsel %vm213, %v193, 0
  %v218 = vsel %vm213, %v197, 0
  %220 = vmatprep.subr.bf16.mxu0 0
  %221 = vmatpush1.bf16.xpose.msra.mxu0 0
  %222 = vmatprep.subr.bf16.mxu0 0
  %223 = vmatpush1.bf16.xpose.msra.mxu0 0
  %224 = vmatprep.subr.bf16.mxu0 0
  %225 = vmatpush1.bf16.xpose.msra.mxu0 0
  %226 = vmatprep.subr.bf16.mxu0 0
  %227 = vmatpush1.bf16.xpose.msra.mxu0 0
  %228 = vmatprep.subr.bf16.mxu0 0
  %229 = vmatpush1.bf16.xpose.msra.mxu0 0
  %230 = vmatprep.subr.bf16.mxu0 0
  %231 = vmatpush1.bf16.xpose.msra.mxu0 0
  %232 = vmatprep.subr.bf16.mxu0 0
  %233 = vmatpush1.bf16.xpose.msra.mxu0 0
  %234 = vmatprep.subr.bf16.mxu0 0
  %235 = vmatpush1.bf16.xpose.msra.mxu0 %v218
  %236 = vmatprep.subr.bf16.mxu0 0
  %237 = vmatpush2.bf16.xpose.msra.mxu0 0
  %238 = vmatprep.subr.bf16.mxu0 0
  %239 = vmatpush2.bf16.xpose.msra.mxu0 0
  %240 = vmatprep.subr.bf16.mxu0 0
  %241 = vmatpush2.bf16.xpose.msra.mxu0 0
  %242 = vmatprep.subr.bf16.mxu0 0
  %243 = vmatpush2.bf16.xpose.msra.mxu0 0
  %244 = vmatprep.subr.bf16.mxu0 0
  %245 = vmatpush2.bf16.xpose.msra.mxu0 0
  %246 = vmatprep.subr.bf16.mxu0 0
  %247 = vmatpush2.bf16.xpose.msra.mxu0 0
  %248 = vmatprep.subr.bf16.mxu0 0
  %249 = vmatpush2.bf16.xpose.msra.mxu0 0
  %250 = vmatprep.subr.bf16.mxu0 0
  %251 = vmatpush2.bf16.xpose.msra.mxu0 0
  %252 = vmatprep.mubr.bf16.mxu0 0
  %253 = vmatmul.mubr.bf16.gmra.mxu0 %v215
  %v254 = vpop.f32.mrf.mxu0
  %v255 = vadd.f32 %v209, %v254
  %v256 = vpop.f32.mrf.mxu0
  %v257 = vpop.f32.mrf.mxu0
  %v258 = vpop.f32.mrf.mxu0
  %259 = vdwg.mxu0
  %v261 = vsel %vm213, %v194, 0
  %v264 = vsel %vm213, %v198, 0
  %266 = vmatprep.subr.bf16.mxu0 0
  %267 = vmatpush1.bf16.xpose.msra.mxu0 0
  %268 = vmatprep.subr.bf16.mxu0 0
  %269 = vmatpush1.bf16.xpose.msra.mxu0 0
  %270 = vmatprep.subr.bf16.mxu0 0
  %271 = vmatpush1.bf16.xpose.msra.mxu0 0
  %272 = vmatprep.subr.bf16.mxu0 0
  %273 = vmatpush1.bf16.xpose.msra.mxu0 0
  %274 = vmatprep.subr.bf16.mxu0 0
  %275 = vmatpush1.bf16.xpose.msra.mxu0 0
  %276 = vmatprep.subr.bf16.mxu0 0
  %277 = vmatpush1.bf16.xpose.msra.mxu0 0
  %278 = vmatprep.subr.bf16.mxu0 0
  %279 = vmatpush1.bf16.xpose.msra.mxu0 0
  %280 = vmatprep.subr.bf16.mxu0 0
  %281 = vmatpush1.bf16.xpose.msra.mxu0 %v264
  %282 = vmatprep.subr.bf16.mxu0 0
  %283 = vmatpush2.bf16.xpose.msra.mxu0 0
  %284 = vmatprep.subr.bf16.mxu0 0
  %285 = vmatpush2.bf16.xpose.msra.mxu0 0
  %286 = vmatprep.subr.bf16.mxu0 0
  %287 = vmatpush2.bf16.xpose.msra.mxu0 0
  %288 = vmatprep.subr.bf16.mxu0 0
  %289 = vmatpush2.bf16.xpose.msra.mxu0 0
  %290 = vmatprep.subr.bf16.mxu0 0
  %291 = vmatpush2.bf16.xpose.msra.mxu0 0
  %292 = vmatprep.subr.bf16.mxu0 0
  %293 = vmatpush2.bf16.xpose.msra.mxu0 0
  %294 = vmatprep.subr.bf16.mxu0 0
  %295 = vmatpush2.bf16.xpose.msra.mxu0 0
  %296 = vmatprep.subr.bf16.mxu0 0
  %297 = vmatpush2.bf16.xpose.msra.mxu0 0
  %298 = vmatprep.mubr.bf16.mxu0 0
  %299 = vmatmul.mubr.bf16.gmra.mxu0 %v261
  %v300 = vpop.f32.mrf.mxu0
  %v301 = vadd.f32 %v210, %v300
  %v302 = vpop.f32.mrf.mxu0
  %v303 = vpop.f32.mrf.mxu0
  %v304 = vpop.f32.mrf.mxu0
  %305 = vdwg.mxu0
  %v307 = vsel %vm213, %v195, 0
  %v310 = vsel %vm213, %v199, 0
  %312 = vmatprep.subr.bf16.mxu0 0
  %313 = vmatpush1.bf16.xpose.msra.mxu0 0
  %314 = vmatprep.subr.bf16.mxu0 0
  %315 = vmatpush1.bf16.xpose.msra.mxu0 0
  %316 = vmatprep.subr.bf16.mxu0 0
  %317 = vmatpush1.bf16.xpose.msra.mxu0 0
  %318 = vmatprep.subr.bf16.mxu0 0
  %319 = vmatpush1.bf16.xpose.msra.mxu0 0
  %320 = vmatprep.subr.bf16.mxu0 0
  %321 = vmatpush1.bf16.xpose.msra.mxu0 0
  %322 = vmatprep.subr.bf16.mxu0 0
  %323 = vmatpush1.bf16.xpose.msra.mxu0 0
  %324 = vmatprep.subr.bf16.mxu0 0
  %325 = vmatpush1.bf16.xpose.msra.mxu0 0
  %326 = vmatprep.subr.bf16.mxu0 0
  %327 = vmatpush1.bf16.xpose.msra.mxu0 %v310
  %328 = vmatprep.subr.bf16.mxu0 0
  %329 = vmatpush2.bf16.xpose.msra.mxu0 0
  %330 = vmatprep.subr.bf16.mxu0 0
  %331 = vmatpush2.bf16.xpose.msra.mxu0 0
  %332 = vmatprep.subr.bf16.mxu0 0
  %333 = vmatpush2.bf16.xpose.msra.mxu0 0
  %334 = vmatprep.subr.bf16.mxu0 0
  %335 = vmatpush2.bf16.xpose.msra.mxu0 0
  %336 = vmatprep.subr.bf16.mxu0 0
  %337 = vmatpush2.bf16.xpose.msra.mxu0 0
  %338 = vmatprep.subr.bf16.mxu0 0
  %339 = vmatpush2.bf16.xpose.msra.mxu0 0
  %340 = vmatprep.subr.bf16.mxu0 0
  %341 = vmatpush2.bf16.xpose.msra.mxu0 0
  %342 = vmatprep.subr.bf16.mxu0 0
  %343 = vmatpush2.bf16.xpose.msra.mxu0 0
  %344 = vmatprep.mubr.bf16.mxu0 0
  %345 = vmatmul.mubr.bf16.gmra.mxu0 %v307
  %v346 = vpop.f32.mrf.mxu0
  %v347 = vadd.f32 %v211, %v346
  %v348 = vpop.f32.mrf.mxu0
  %v349 = vpop.f32.mrf.mxu0
  %v350 = vpop.f32.mrf.mxu0
  %351 = vdwg.mxu0
  %v353 = vsel %vm213, %v196, 0
  %v356 = vsel %vm213, %v200, 0
  %358 = vmatprep.subr.bf16.mxu0 0
  %359 = vmatpush1.bf16.xpose.msra.mxu0 0
  %360 = vmatprep.subr.bf16.mxu0 0
  %361 = vmatpush1.bf16.xpose.msra.mxu0 0
  %362 = vmatprep.subr.bf16.mxu0 0
  %363 = vmatpush1.bf16.xpose.msra.mxu0 0
  %364 = vmatprep.subr.bf16.mxu0 0
  %365 = vmatpush1.bf16.xpose.msra.mxu0 0
  %366 = vmatprep.subr.bf16.mxu0 0
  %367 = vmatpush1.bf16.xpose.msra.mxu0 0
  %368 = vmatprep.subr.bf16.mxu0 0
  %369 = vmatpush1.bf16.xpose.msra.mxu0 0
  %370 = vmatprep.subr.bf16.mxu0 0
  %371 = vmatpush1.bf16.xpose.msra.mxu0 0
  %372 = vmatprep.subr.bf16.mxu0 0
  %373 = vmatpush1.bf16.xpose.msra.mxu0 %v356
  %374 = vmatprep.subr.bf16.mxu0 0
  %375 = vmatpush2.bf16.xpose.msra.mxu0 0
  %376 = vmatprep.subr.bf16.mxu0 0
  %377 = vmatpush2.bf16.xpose.msra.mxu0 0
  %378 = vmatprep.subr.bf16.mxu0 0
  %379 = vmatpush2.bf16.xpose.msra.mxu0 0
  %380 = vmatprep.subr.bf16.mxu0 0
  %381 = vmatpush2.bf16.xpose.msra.mxu0 0
  %382 = vmatprep.subr.bf16.mxu0 0
  %383 = vmatpush2.bf16.xpose.msra.mxu0 0
  %384 = vmatprep.subr.bf16.mxu0 0
  %385 = vmatpush2.bf16.xpose.msra.mxu0 0
  %386 = vmatprep.subr.bf16.mxu0 0
  %387 = vmatpush2.bf16.xpose.msra.mxu0 0
  %388 = vmatprep.subr.bf16.mxu0 0
  %389 = vmatpush2.bf16.xpose.msra.mxu0 0
  %390 = vmatprep.mubr.bf16.mxu0 0
  %391 = vmatmul.mubr.bf16.gmra.mxu0 %v353
  %v392 = vpop.f32.mrf.mxu0
  %v393 = vadd.f32 %v212, %v392
  %v394 = vpop.f32.mrf.mxu0
  %v395 = vpop.f32.mrf.mxu0
  %v396 = vpop.f32.mrf.mxu0
  %397 = vdwg.mxu0
  %v398 = vsel %vm213, %v255, -inf
  %399 = vmax.xlane.f32.xlu0 %v398
  %v400 = vpop.xlane.xlu0 %399
  %v401 = vsel %vm213, %v301, -inf
  %402 = vmax.xlane.f32.xlu0 %v401
  %v403 = vpop.xlane.xlu0 %402
  %v404 = vsel %vm213, %v347, -inf
  %405 = vmax.xlane.f32.xlu0 %v404
  %v406 = vpop.xlane.xlu0 %405
  %v407 = vsel %vm213, %v393, -inf
  %408 = vmax.xlane.f32.xlu0 %v407
  %v409 = vpop.xlane.xlu0 %408
  %v410 = vsub.f32 %v255, %v400
  %v411 = vsub.f32 %v301, %v403
  %v412 = vsub.f32 %v347, %v406
  %v413 = vsub.f32 %v393, %v409
  %v414 = vmul.f32 %v410, 1.442695
  %v415 = vpow.pop %v414
  %v416 = vmul.f32 %v411, 1.442695
  %v417 = vpow.pop %v416
  %v418 = vmul.f32 %v412, 1.442695
  %v419 = vpow.pop %v418
  %v420 = vmul.f32 %v413, 1.442695
  %v421 = vpow.pop %v420
  %v422 = vsel %vm213, %v415, 0.0
  %423 = vadd.xlane.f32.xlu0 %v422
  %v424 = vpop.xlane.xlu0 %423
  %v425 = vsel %vm213, %v417, 0.0
  %426 = vadd.xlane.f32.xlu0 %v425
  %v427 = vpop.xlane.xlu0 %426
  %v428 = vsel %vm213, %v419, 0.0
  %429 = vadd.xlane.f32.xlu0 %v428
  %v430 = vpop.xlane.xlu0 %429
  %v431 = vsel %vm213, %v421, 0.0
  %432 = vadd.xlane.f32.xlu0 %v431
  %v433 = vpop.xlane.xlu0 %432
  %v434 = vrcp.pop %v424
  %v435 = vrcp.pop %v427
  %v436 = vrcp.pop %v430
  %v437 = vrcp.pop %v433
  %v438 = vmul.f32 %v415, %v434
  %v439 = vmul.f32 %v417, %v435
  %v440 = vmul.f32 %v419, %v436
  %v441 = vmul.f32 %v421, %v437
  %vm442 = vcmp.gt.f32.partialorder %v209, -5e+08
  %vm443 = vcmp.gt.f32.partialorder %v210, -5e+08
  %vm444 = vcmp.gt.f32.partialorder %v211, -5e+08
  %vm445 = vcmp.gt.f32.partialorder %v212, -5e+08
  %v446 = vsel %vm442, %v438, 0.0
  %v447 = vsel %vm443, %v439, 0.0
  %v448 = vsel %vm444, %v440, 0.0
  %v449 = vsel %vm445, %v441, 0.0
  %v450 = vpack.c.bf16 %v446, %v446
  %v451 = vpack.c.bf16 %v447, %v447
  %v452 = vpack.c.bf16 %v448, %v448
  %v453 = vpack.c.bf16 %v449, %v449
  %v455 = vsel %vm213, %v450, 0
  %vm457 = vcmask 1043456
  %v459 = vsel %vm457, %v201, 0
  %461 = vmatprep.subr.bf16.mxu0 0
  %462 = vmatpush1.bf16.msra.mxu0 0
  %463 = vmatprep.subr.bf16.mxu0 0
  %464 = vmatpush1.bf16.msra.mxu0 0
  %465 = vmatprep.subr.bf16.mxu0 0
  %466 = vmatpush1.bf16.msra.mxu0 0
  %467 = vmatprep.subr.bf16.mxu0 0
  %468 = vmatpush1.bf16.msra.mxu0 0
  %469 = vmatprep.subr.bf16.mxu0 0
  %470 = vmatpush1.bf16.msra.mxu0 0
  %471 = vmatprep.subr.bf16.mxu0 0
  %472 = vmatpush1.bf16.msra.mxu0 0
  %473 = vmatprep.subr.bf16.mxu0 0
  %474 = vmatpush1.bf16.msra.mxu0 0
  %475 = vmatprep.subr.bf16.mxu0 0
  %476 = vmatpush1.bf16.msra.mxu0 %v459
  %477 = vmatprep.subr.bf16.mxu0 0
  %478 = vmatpush2.bf16.msra.mxu0 0
  %479 = vmatprep.subr.bf16.mxu0 0
  %480 = vmatpush2.bf16.msra.mxu0 0
  %481 = vmatprep.subr.bf16.mxu0 0
  %482 = vmatpush2.bf16.msra.mxu0 0
  %483 = vmatprep.subr.bf16.mxu0 0
  %484 = vmatpush2.bf16.msra.mxu0 0
  %485 = vmatprep.subr.bf16.mxu0 0
  %486 = vmatpush2.bf16.msra.mxu0 0
  %487 = vmatprep.subr.bf16.mxu0 0
  %488 = vmatpush2.bf16.msra.mxu0 0
  %489 = vmatprep.subr.bf16.mxu0 0
  %490 = vmatpush2.bf16.msra.mxu0 0
  %491 = vmatprep.subr.bf16.mxu0 0
  %492 = vmatpush2.bf16.msra.mxu0 0
  %493 = vmatprep.mubr.bf16.mxu0 0
  %494 = vmatmul.mubr.bf16.gmra.mxu0 %v455
  %v495 = vpop.f32.mrf.mxu0
  %v496 = vadd.f32 0.0, %v495
  %v497 = vpop.f32.mrf.mxu0
  %v498 = vpop.f32.mrf.mxu0
  %v499 = vpop.f32.mrf.mxu0
  %500 = vdwg.mxu0
  %v502 = vsel %vm213, %v451, 0
  %v505 = vsel %vm457, %v202, 0
  %507 = vmatprep.subr.bf16.mxu0 0
  %508 = vmatpush1.bf16.msra.mxu0 0
  %509 = vmatprep.subr.bf16.mxu0 0
  %510 = vmatpush1.bf16.msra.mxu0 0
  %511 = vmatprep.subr.bf16.mxu0 0
  %512 = vmatpush1.bf16.msra.mxu0 0
  %513 = vmatprep.subr.bf16.mxu0 0
  %514 = vmatpush1.bf16.msra.mxu0 0
  %515 = vmatprep.subr.bf16.mxu0 0
  %516 = vmatpush1.bf16.msra.mxu0 0
  %517 = vmatprep.subr.bf16.mxu0 0
  %518 = vmatpush1.bf16.msra.mxu0 0
  %519 = vmatprep.subr.bf16.mxu0 0
  %520 = vmatpush1.bf16.msra.mxu0 0
  %521 = vmatprep.subr.bf16.mxu0 0
  %522 = vmatpush1.bf16.msra.mxu0 %v505
  %523 = vmatprep.subr.bf16.mxu0 0
  %524 = vmatpush2.bf16.msra.mxu0 0
  %525 = vmatprep.subr.bf16.mxu0 0
  %526 = vmatpush2.bf16.msra.mxu0 0
  %527 = vmatprep.subr.bf16.mxu0 0
  %528 = vmatpush2.bf16.msra.mxu0 0
  %529 = vmatprep.subr.bf16.mxu0 0
  %530 = vmatpush2.bf16.msra.mxu0 0
  %531 = vmatprep.subr.bf16.mxu0 0
  %532 = vmatpush2.bf16.msra.mxu0 0
  %533 = vmatprep.subr.bf16.mxu0 0
  %534 = vmatpush2.bf16.msra.mxu0 0
  %535 = vmatprep.subr.bf16.mxu0 0
  %536 = vmatpush2.bf16.msra.mxu0 0
  %537 = vmatprep.subr.bf16.mxu0 0
  %538 = vmatpush2.bf16.msra.mxu0 0
  %539 = vmatprep.mubr.bf16.mxu0 0
  %540 = vmatmul.mubr.bf16.gmra.mxu0 %v502
  %v541 = vpop.f32.mrf.mxu0
  %v542 = vadd.f32 0.0, %v541
  %v543 = vpop.f32.mrf.mxu0
  %v544 = vpop.f32.mrf.mxu0
  %v545 = vpop.f32.mrf.mxu0
  %546 = vdwg.mxu0
  %v548 = vsel %vm213, %v452, 0
  %v551 = vsel %vm457, %v203, 0
  %553 = vmatprep.subr.bf16.mxu0 0
  %554 = vmatpush1.bf16.msra.mxu0 0
  %555 = vmatprep.subr.bf16.mxu0 0
  %556 = vmatpush1.bf16.msra.mxu0 0
  %557 = vmatprep.subr.bf16.mxu0 0
  %558 = vmatpush1.bf16.msra.mxu0 0
  %559 = vmatprep.subr.bf16.mxu0 0
  %560 = vmatpush1.bf16.msra.mxu0 0
  %561 = vmatprep.subr.bf16.mxu0 0
  %562 = vmatpush1.bf16.msra.mxu0 0
  %563 = vmatprep.subr.bf16.mxu0 0
  %564 = vmatpush1.bf16.msra.mxu0 0
  %565 = vmatprep.subr.bf16.mxu0 0
  %566 = vmatpush1.bf16.msra.mxu0 0
  %567 = vmatprep.subr.bf16.mxu0 0
  %568 = vmatpush1.bf16.msra.mxu0 %v551
  %569 = vmatprep.subr.bf16.mxu0 0
  %570 = vmatpush2.bf16.msra.mxu0 0
  %571 = vmatprep.subr.bf16.mxu0 0
  %572 = vmatpush2.bf16.msra.mxu0 0
  %573 = vmatprep.subr.bf16.mxu0 0
  %574 = vmatpush2.bf16.msra.mxu0 0
  %575 = vmatprep.subr.bf16.mxu0 0
  %576 = vmatpush2.bf16.msra.mxu0 0
  %577 = vmatprep.subr.bf16.mxu0 0
  %578 = vmatpush2.bf16.msra.mxu0 0
  %579 = vmatprep.subr.bf16.mxu0 0
  %580 = vmatpush2.bf16.msra.mxu0 0
  %581 = vmatprep.subr.bf16.mxu0 0
  %582 = vmatpush2.bf16.msra.mxu0 0
  %583 = vmatprep.subr.bf16.mxu0 0
  %584 = vmatpush2.bf16.msra.mxu0 0
  %585 = vmatprep.mubr.bf16.mxu0 0
  %586 = vmatmul.mubr.bf16.gmra.mxu0 %v548
  %v587 = vpop.f32.mrf.mxu0
  %v588 = vadd.f32 0.0, %v587
  %v589 = vpop.f32.mrf.mxu0
  %v590 = vpop.f32.mrf.mxu0
  %v591 = vpop.f32.mrf.mxu0
  %592 = vdwg.mxu0
  %v594 = vsel %vm213, %v453, 0
  %v597 = vsel %vm457, %v204, 0
  %599 = vmatprep.subr.bf16.mxu0 0
  %600 = vmatpush1.bf16.msra.mxu0 0
  %601 = vmatprep.subr.bf16.mxu0 0
  %602 = vmatpush1.bf16.msra.mxu0 0
  %603 = vmatprep.subr.bf16.mxu0 0
  %604 = vmatpush1.bf16.msra.mxu0 0
  %605 = vmatprep.subr.bf16.mxu0 0
  %606 = vmatpush1.bf16.msra.mxu0 0
  %607 = vmatprep.subr.bf16.mxu0 0
  %608 = vmatpush1.bf16.msra.mxu0 0
  %609 = vmatprep.subr.bf16.mxu0 0
  %610 = vmatpush1.bf16.msra.mxu0 0
  %611 = vmatprep.subr.bf16.mxu0 0
  %612 = vmatpush1.bf16.msra.mxu0 0
  %613 = vmatprep.subr.bf16.mxu0 0
  %614 = vmatpush1.bf16.msra.mxu0 %v597
  %615 = vmatprep.subr.bf16.mxu0 0
  %616 = vmatpush2.bf16.msra.mxu0 0
  %617 = vmatprep.subr.bf16.mxu0 0
  %618 = vmatpush2.bf16.msra.mxu0 0
  %619 = vmatprep.subr.bf16.mxu0 0
  %620 = vmatpush2.bf16.msra.mxu0 0
  %621 = vmatprep.subr.bf16.mxu0 0
  %622 = vmatpush2.bf16.msra.mxu0 0
  %623 = vmatprep.subr.bf16.mxu0 0
  %624 = vmatpush2.bf16.msra.mxu0 0
  %625 = vmatprep.subr.bf16.mxu0 0
  %626 = vmatpush2.bf16.msra.mxu0 0
  %627 = vmatprep.subr.bf16.mxu0 0
  %628 = vmatpush2.bf16.msra.mxu0 0
  %629 = vmatprep.subr.bf16.mxu0 0
  %630 = vmatpush2.bf16.msra.mxu0 0
  %631 = vmatprep.mubr.bf16.mxu0 0
  %632 = vmatmul.mubr.bf16.gmra.mxu0 %v594
  %v633 = vpop.f32.mrf.mxu0
  %v634 = vadd.f32 0.0, %v633
  %v635 = vpop.f32.mrf.mxu0
  %v636 = vpop.f32.mrf.mxu0
  %v637 = vpop.f32.mrf.mxu0
  %638 = vdwg.mxu0
  %640 = vrot.lane.b32.xlu0 %v542, 8
  %v641 = vpop.permute.xlu0 %640
  %644 = vrot.lane.b32.xlu0 %v588, 16
  %v645 = vpop.permute.xlu0 %644
  %648 = vrot.lane.b32.xlu0 %v634, 24
  %v649 = vpop.permute.xlu0 %648
  %v651 = vsel %vm213, %v496, %v641
  %vm652 = vcmask 130048
  %v653 = vsel %vm652, %v651, %v645
  %vm654 = vcmask 195584
  %v655 = vsel %vm654, %v653, %v649
  %s656 = scalar_lea.vmem %s1, 16
  %v657 = vld [vmem:[%s656] sm:$0xf]
  %v658 = vld [vmem:[%s656 + $0x4] sm:$0xf]
  %v659 = vld [vmem:[%s656 + $0x8] sm:$0xf]
  %v660 = vld [vmem:[%s656 + $0xc] sm:$0xf]
  %v661 = vunpack.c.l.bf16 %v657
  %v662 = vunpack.c.l.bf16 %v658
  %v663 = vunpack.c.l.bf16 %v659
  %v664 = vunpack.c.l.bf16 %v660
  %v666 = vrot.slane %v193, 4
  %v668 = vrot.slane %v197, 4
  %v670 = vsel %vm213, %v666, 0
  %v673 = vsel %vm213, %v668, 0
  %675 = vmatprep.subr.bf16.mxu0 0
  %676 = vmatpush1.bf16.xpose.msra.mxu0 0
  %677 = vmatprep.subr.bf16.mxu0 0
  %678 = vmatpush1.bf16.xpose.msra.mxu0 0
  %679 = vmatprep.subr.bf16.mxu0 0
  %680 = vmatpush1.bf16.xpose.msra.mxu0 0
  %681 = vmatprep.subr.bf16.mxu0 0
  %682 = vmatpush1.bf16.xpose.msra.mxu0 0
  %683 = vmatprep.subr.bf16.mxu0 0
  %684 = vmatpush1.bf16.xpose.msra.mxu0 0
  %685 = vmatprep.subr.bf16.mxu0 0
  %686 = vmatpush1.bf16.xpose.msra.mxu0 0
  %687 = vmatprep.subr.bf16.mxu0 0
  %688 = vmatpush1.bf16.xpose.msra.mxu0 0
  %689 = vmatprep.subr.bf16.mxu0 0
  %690 = vmatpush1.bf16.xpose.msra.mxu0 %v673
  %691 = vmatprep.subr.bf16.mxu0 0
  %692 = vmatpush2.bf16.xpose.msra.mxu0 0
  %693 = vmatprep.subr.bf16.mxu0 0
  %694 = vmatpush2.bf16.xpose.msra.mxu0 0
  %695 = vmatprep.subr.bf16.mxu0 0
  %696 = vmatpush2.bf16.xpose.msra.mxu0 0
  %697 = vmatprep.subr.bf16.mxu0 0
  %698 = vmatpush2.bf16.xpose.msra.mxu0 0
  %699 = vmatprep.subr.bf16.mxu0 0
  %700 = vmatpush2.bf16.xpose.msra.mxu0 0
  %701 = vmatprep.subr.bf16.mxu0 0
  %702 = vmatpush2.bf16.xpose.msra.mxu0 0
  %703 = vmatprep.subr.bf16.mxu0 0
  %704 = vmatpush2.bf16.xpose.msra.mxu0 0
  %705 = vmatprep.subr.bf16.mxu0 0
  %706 = vmatpush2.bf16.xpose.msra.mxu0 0
  %707 = vmatprep.mubr.bf16.mxu0 0
  %708 = vmatmul.mubr.bf16.gmra.mxu0 %v670
  %v709 = vpop.f32.mrf.mxu0
  %v710 = vadd.f32 %v661, %v709
  %v711 = vpop.f32.mrf.mxu0
  %v712 = vpop.f32.mrf.mxu0
  %v713 = vpop.f32.mrf.mxu0
  %714 = vdwg.mxu0
  %v716 = vrot.slane %v194, 4
  %v718 = vrot.slane %v198, 4
  %v720 = vsel %vm213, %v716, 0
  %v723 = vsel %vm213, %v718, 0
  %725 = vmatprep.subr.bf16.mxu0 0
  %726 = vmatpush1.bf16.xpose.msra.mxu0 0
  %727 = vmatprep.subr.bf16.mxu0 0
  %728 = vmatpush1.bf16.xpose.msra.mxu0 0
  %729 = vmatprep.subr.bf16.mxu0 0
  %730 = vmatpush1.bf16.xpose.msra.mxu0 0
  %731 = vmatprep.subr.bf16.mxu0 0
  %732 = vmatpush1.bf16.xpose.msra.mxu0 0
  %733 = vmatprep.subr.bf16.mxu0 0
  %734 = vmatpush1.bf16.xpose.msra.mxu0 0
  %735 = vmatprep.subr.bf16.mxu0 0
  %736 = vmatpush1.bf16.xpose.msra.mxu0 0
  %737 = vmatprep.subr.bf16.mxu0 0
  %738 = vmatpush1.bf16.xpose.msra.mxu0 0
  %739 = vmatprep.subr.bf16.mxu0 0
  %740 = vmatpush1.bf16.xpose.msra.mxu0 %v723
  %741 = vmatprep.subr.bf16.mxu0 0
  %742 = vmatpush2.bf16.xpose.msra.mxu0 0
  %743 = vmatprep.subr.bf16.mxu0 0
  %744 = vmatpush2.bf16.xpose.msra.mxu0 0
  %745 = vmatprep.subr.bf16.mxu0 0
  %746 = vmatpush2.bf16.xpose.msra.mxu0 0
  %747 = vmatprep.subr.bf16.mxu0 0
  %748 = vmatpush2.bf16.xpose.msra.mxu0 0
  %749 = vmatprep.subr.bf16.mxu0 0
  %750 = vmatpush2.bf16.xpose.msra.mxu0 0
  %751 = vmatprep.subr.bf16.mxu0 0
  %752 = vmatpush2.bf16.xpose.msra.mxu0 0
  %753 = vmatprep.subr.bf16.mxu0 0
  %754 = vmatpush2.bf16.xpose.msra.mxu0 0
  %755 = vmatprep.subr.bf16.mxu0 0
  %756 = vmatpush2.bf16.xpose.msra.mxu0 0
  %757 = vmatprep.mubr.bf16.mxu0 0
  %758 = vmatmul.mubr.bf16.gmra.mxu0 %v720
  %v759 = vpop.f32.mrf.mxu0
  %v760 = vadd.f32 %v662, %v759
  %v761 = vpop.f32.mrf.mxu0
  %v762 = vpop.f32.mrf.mxu0
  %v763 = vpop.f32.mrf.mxu0
  %764 = vdwg.mxu0
  %v766 = vrot.slane %v195, 4
  %v768 = vrot.slane %v199, 4
  %v770 = vsel %vm213, %v766, 0
  %v773 = vsel %vm213, %v768, 0
  %775 = vmatprep.subr.bf16.mxu0 0
  %776 = vmatpush1.bf16.xpose.msra.mxu0 0
  %777 = vmatprep.subr.bf16.mxu0 0
  %778 = vmatpush1.bf16.xpose.msra.mxu0 0
  %779 = vmatprep.subr.bf16.mxu0 0
  %780 = vmatpush1.bf16.xpose.msra.mxu0 0
  %781 = vmatprep.subr.bf16.mxu0 0
  %782 = vmatpush1.bf16.xpose.msra.mxu0 0
  %783 = vmatprep.subr.bf16.mxu0 0
  %784 = vmatpush1.bf16.xpose.msra.mxu0 0
  %785 = vmatprep.subr.bf16.mxu0 0
  %786 = vmatpush1.bf16.xpose.msra.mxu0 0
  %787 = vmatprep.subr.bf16.mxu0 0
  %788 = vmatpush1.bf16.xpose.msra.mxu0 0
  %789 = vmatprep.subr.bf16.mxu0 0
  %790 = vmatpush1.bf16.xpose.msra.mxu0 %v773
  %791 = vmatprep.subr.bf16.mxu0 0
  %792 = vmatpush2.bf16.xpose.msra.mxu0 0
  %793 = vmatprep.subr.bf16.mxu0 0
  %794 = vmatpush2.bf16.xpose.msra.mxu0 0
  %795 = vmatprep.subr.bf16.mxu0 0
  %796 = vmatpush2.bf16.xpose.msra.mxu0 0
  %797 = vmatprep.subr.bf16.mxu0 0
  %798 = vmatpush2.bf16.xpose.msra.mxu0 0
  %799 = vmatprep.subr.bf16.mxu0 0
  %800 = vmatpush2.bf16.xpose.msra.mxu0 0
  %801 = vmatprep.subr.bf16.mxu0 0
  %802 = vmatpush2.bf16.xpose.msra.mxu0 0
  %803 = vmatprep.subr.bf16.mxu0 0
  %804 = vmatpush2.bf16.xpose.msra.mxu0 0
  %805 = vmatprep.subr.bf16.mxu0 0
  %806 = vmatpush2.bf16.xpose.msra.mxu0 0
  %807 = vmatprep.mubr.bf16.mxu0 0
  %808 = vmatmul.mubr.bf16.gmra.mxu0 %v770
  %v809 = vpop.f32.mrf.mxu0
  %v810 = vadd.f32 %v663, %v809
  %v811 = vpop.f32.mrf.mxu0
  %v812 = vpop.f32.mrf.mxu0
  %v813 = vpop.f32.mrf.mxu0
  %814 = vdwg.mxu0
  %v816 = vrot.slane %v196, 4
  %v818 = vrot.slane %v200, 4
  %v820 = vsel %vm213, %v816, 0
  %v823 = vsel %vm213, %v818, 0
  %825 = vmatprep.subr.bf16.mxu0 0
  %826 = vmatpush1.bf16.xpose.msra.mxu0 0
  %827 = vmatprep.subr.bf16.mxu0 0
  %828 = vmatpush1.bf16.xpose.msra.mxu0 0
  %829 = vmatprep.subr.bf16.mxu0 0
  %830 = vmatpush1.bf16.xpose.msra.mxu0 0
  %831 = vmatprep.subr.bf16.mxu0 0
  %832 = vmatpush1.bf16.xpose.msra.mxu0 0
  %833 = vmatprep.subr.bf16.mxu0 0
  %834 = vmatpush1.bf16.xpose.msra.mxu0 0
  %835 = vmatprep.subr.bf16.mxu0 0
  %836 = vmatpush1.bf16.xpose.msra.mxu0 0
  %837 = vmatprep.subr.bf16.mxu0 0
  %838 = vmatpush1.bf16.xpose.msra.mxu0 0
  %839 = vmatprep.subr.bf16.mxu0 0
  %840 = vmatpush1.bf16.xpose.msra.mxu0 %v823
  %841 = vmatprep.subr.bf16.mxu0 0
  %842 = vmatpush2.bf16.xpose.msra.mxu0 0
  %843 = vmatprep.subr.bf16.mxu0 0
  %844 = vmatpush2.bf16.xpose.msra.mxu0 0
  %845 = vmatprep.subr.bf16.mxu0 0
  %846 = vmatpush2.bf16.xpose.msra.mxu0 0
  %847 = vmatprep.subr.bf16.mxu0 0
  %848 = vmatpush2.bf16.xpose.msra.mxu0 0
  %849 = vmatprep.subr.bf16.mxu0 0
  %850 = vmatpush2.bf16.xpose.msra.mxu0 0
  %851 = vmatprep.subr.bf16.mxu0 0
  %852 = vmatpush2.bf16.xpose.msra.mxu0 0
  %853 = vmatprep.subr.bf16.mxu0 0
  %854 = vmatpush2.bf16.xpose.msra.mxu0 0
  %855 = vmatprep.subr.bf16.mxu0 0
  %856 = vmatpush2.bf16.xpose.msra.mxu0 0
  %857 = vmatprep.mubr.bf16.mxu0 0
  %858 = vmatmul.mubr.bf16.gmra.mxu0 %v820
  %v859 = vpop.f32.mrf.mxu0
  %v860 = vadd.f32 %v664, %v859
  %v861 = vpop.f32.mrf.mxu0
  %v862 = vpop.f32.mrf.mxu0
  %v863 = vpop.f32.mrf.mxu0
  %864 = vdwg.mxu0
  %v865 = vsel %vm213, %v710, -inf
  %866 = vmax.xlane.f32.xlu0 %v865
  %v867 = vpop.xlane.xlu0 %866
  %v868 = vsel %vm213, %v760, -inf
  %869 = vmax.xlane.f32.xlu0 %v868
  %v870 = vpop.xlane.xlu0 %869
  %v871 = vsel %vm213, %v810, -inf
  %872 = vmax.xlane.f32.xlu0 %v871
  %v873 = vpop.xlane.xlu0 %872
  %v874 = vsel %vm213, %v860, -inf
  %875 = vmax.xlane.f32.xlu0 %v874
  %v876 = vpop.xlane.xlu0 %875
  %v877 = vsub.f32 %v710, %v867
  %v878 = vsub.f32 %v760, %v870
  %v879 = vsub.f32 %v810, %v873
  %v880 = vsub.f32 %v860, %v876
  %v881 = vmul.f32 %v877, 1.442695
  %v882 = vpow.pop %v881
  %v883 = vmul.f32 %v878, 1.442695
  %v884 = vpow.pop %v883
  %v885 = vmul.f32 %v879, 1.442695
  %v886 = vpow.pop %v885
  %v887 = vmul.f32 %v880, 1.442695
  %v888 = vpow.pop %v887
  %v889 = vsel %vm213, %v882, 0.0
  %890 = vadd.xlane.f32.xlu0 %v889
  %v891 = vpop.xlane.xlu0 %890
  %v892 = vsel %vm213, %v884, 0.0
  %893 = vadd.xlane.f32.xlu0 %v892
  %v894 = vpop.xlane.xlu0 %893
  %v895 = vsel %vm213, %v886, 0.0
  %896 = vadd.xlane.f32.xlu0 %v895
  %v897 = vpop.xlane.xlu0 %896
  %v898 = vsel %vm213, %v888, 0.0
  %899 = vadd.xlane.f32.xlu0 %v898
  %v900 = vpop.xlane.xlu0 %899
  %v901 = vrcp.pop %v891
  %v902 = vrcp.pop %v894
  %v903 = vrcp.pop %v897
  %v904 = vrcp.pop %v900
  %v905 = vmul.f32 %v882, %v901
  %v906 = vmul.f32 %v884, %v902
  %v907 = vmul.f32 %v886, %v903
  %v908 = vmul.f32 %v888, %v904
  %vm909 = vcmp.gt.f32.partialorder %v661, -5e+08
  %vm910 = vcmp.gt.f32.partialorder %v662, -5e+08
  %vm911 = vcmp.gt.f32.partialorder %v663, -5e+08
  %vm912 = vcmp.gt.f32.partialorder %v664, -5e+08
  %v913 = vsel %vm909, %v905, 0.0
  %v914 = vsel %vm910, %v906, 0.0
  %v915 = vsel %vm911, %v907, 0.0
  %v916 = vsel %vm912, %v908, 0.0
  %v917 = vpack.c.bf16 %v913, %v913
  %v918 = vpack.c.bf16 %v914, %v914
  %v919 = vpack.c.bf16 %v915, %v915
  %v920 = vpack.c.bf16 %v916, %v916
  %v922 = vrot.slane %v201, 4
  %v924 = vsel %vm213, %v917, 0
  %v927 = vsel %vm457, %v922, 0
  %929 = vmatprep.subr.bf16.mxu0 0
  %930 = vmatpush1.bf16.msra.mxu0 0
  %931 = vmatprep.subr.bf16.mxu0 0
  %932 = vmatpush1.bf16.msra.mxu0 0
  %933 = vmatprep.subr.bf16.mxu0 0
  %934 = vmatpush1.bf16.msra.mxu0 0
  %935 = vmatprep.subr.bf16.mxu0 0
  %936 = vmatpush1.bf16.msra.mxu0 0
  %937 = vmatprep.subr.bf16.mxu0 0
  %938 = vmatpush1.bf16.msra.mxu0 0
  %939 = vmatprep.subr.bf16.mxu0 0
  %940 = vmatpush1.bf16.msra.mxu0 0
  %941 = vmatprep.subr.bf16.mxu0 0
  %942 = vmatpush1.bf16.msra.mxu0 0
  %943 = vmatprep.subr.bf16.mxu0 0
  %944 = vmatpush1.bf16.msra.mxu0 %v927
  %945 = vmatprep.subr.bf16.mxu0 0
  %946 = vmatpush2.bf16.msra.mxu0 0
  %947 = vmatprep.subr.bf16.mxu0 0
  %948 = vmatpush2.bf16.msra.mxu0 0
  %949 = vmatprep.subr.bf16.mxu0 0
  %950 = vmatpush2.bf16.msra.mxu0 0
  %951 = vmatprep.subr.bf16.mxu0 0
  %952 = vmatpush2.bf16.msra.mxu0 0
  %953 = vmatprep.subr.bf16.mxu0 0
  %954 = vmatpush2.bf16.msra.mxu0 0
  %955 = vmatprep.subr.bf16.mxu0 0
  %956 = vmatpush2.bf16.msra.mxu0 0
  %957 = vmatprep.subr.bf16.mxu0 0
  %958 = vmatpush2.bf16.msra.mxu0 0
  %959 = vmatprep.subr.bf16.mxu0 0
  %960 = vmatpush2.bf16.msra.mxu0 0
  %961 = vmatprep.mubr.bf16.mxu0 0
  %962 = vmatmul.mubr.bf16.gmra.mxu0 %v924
  %v963 = vpop.f32.mrf.mxu0
  %v964 = vadd.f32 0.0, %v963
  %v965 = vpop.f32.mrf.mxu0
  %v966 = vpop.f32.mrf.mxu0
  %v967 = vpop.f32.mrf.mxu0
  %968 = vdwg.mxu0
  %v970 = vrot.slane %v202, 4
  %v972 = vsel %vm213, %v918, 0
  %v975 = vsel %vm457, %v970, 0
  %977 = vmatprep.subr.bf16.mxu0 0
  %978 = vmatpush1.bf16.msra.mxu0 0
  %979 = vmatprep.subr.bf16.mxu0 0
  %980 = vmatpush1.bf16.msra.mxu0 0
  %981 = vmatprep.subr.bf16.mxu0 0
  %982 = vmatpush1.bf16.msra.mxu0 0
  %983 = vmatprep.subr.bf16.mxu0 0
  %984 = vmatpush1.bf16.msra.mxu0 0
  %985 = vmatprep.subr.bf16.mxu0 0
  %986 = vmatpush1.bf16.msra.mxu0 0
  %987 = vmatprep.subr.bf16.mxu0 0
  %988 = vmatpush1.bf16.msra.mxu0 0
  %989 = vmatprep.subr.bf16.mxu0 0
  %990 = vmatpush1.bf16.msra.mxu0 0
  %991 = vmatprep.subr.bf16.mxu0 0
  %992 = vmatpush1.bf16.msra.mxu0 %v975
  %993 = vmatprep.subr.bf16.mxu0 0
  %994 = vmatpush2.bf16.msra.mxu0 0
  %995 = vmatprep.subr.bf16.mxu0 0
  %996 = vmatpush2.bf16.msra.mxu0 0
  %997 = vmatprep.subr.bf16.mxu0 0
  %998 = vmatpush2.bf16.msra.mxu0 0
  %999 = vmatprep.subr.bf16.mxu0 0
  %1000 = vmatpush2.bf16.msra.mxu0 0
  %1001 = vmatprep.subr.bf16.mxu0 0
  %1002 = vmatpush2.bf16.msra.mxu0 0
  %1003 = vmatprep.subr.bf16.mxu0 0
  %1004 = vmatpush2.bf16.msra.mxu0 0
  %1005 = vmatprep.subr.bf16.mxu0 0
  %1006 = vmatpush2.bf16.msra.mxu0 0
  %1007 = vmatprep.subr.bf16.mxu0 0
  %1008 = vmatpush2.bf16.msra.mxu0 0
  %1009 = vmatprep.mubr.bf16.mxu0 0
  %1010 = vmatmul.mubr.bf16.gmra.mxu0 %v972
  %v1011 = vpop.f32.mrf.mxu0
  %v1012 = vadd.f32 0.0, %v1011
  %v1013 = vpop.f32.mrf.mxu0
  %v1014 = vpop.f32.mrf.mxu0
  %v1015 = vpop.f32.mrf.mxu0
  %1016 = vdwg.mxu0
  %v1018 = vrot.slane %v203, 4
  %v1020 = vsel %vm213, %v919, 0
  %v1023 = vsel %vm457, %v1018, 0
  %1025 = vmatprep.subr.bf16.mxu0 0
  %1026 = vmatpush1.bf16.msra.mxu0 0
  %1027 = vmatprep.subr.bf16.mxu0 0
  %1028 = vmatpush1.bf16.msra.mxu0 0
  %1029 = vmatprep.subr.bf16.mxu0 0
  %1030 = vmatpush1.bf16.msra.mxu0 0
  %1031 = vmatprep.subr.bf16.mxu0 0
  %1032 = vmatpush1.bf16.msra.mxu0 0
  %1033 = vmatprep.subr.bf16.mxu0 0
  %1034 = vmatpush1.bf16.msra.mxu0 0
  %1035 = vmatprep.subr.bf16.mxu0 0
  %1036 = vmatpush1.bf16.msra.mxu0 0
  %1037 = vmatprep.subr.bf16.mxu0 0
  %1038 = vmatpush1.bf16.msra.mxu0 0
  %1039 = vmatprep.subr.bf16.mxu0 0
  %1040 = vmatpush1.bf16.msra.mxu0 %v1023
  %1041 = vmatprep.subr.bf16.mxu0 0
  %1042 = vmatpush2.bf16.msra.mxu0 0
  %1043 = vmatprep.subr.bf16.mxu0 0
  %1044 = vmatpush2.bf16.msra.mxu0 0
  %1045 = vmatprep.subr.bf16.mxu0 0
  %1046 = vmatpush2.bf16.msra.mxu0 0
  %1047 = vmatprep.subr.bf16.mxu0 0
  %1048 = vmatpush2.bf16.msra.mxu0 0
  %1049 = vmatprep.subr.bf16.mxu0 0
  %1050 = vmatpush2.bf16.msra.mxu0 0
  %1051 = vmatprep.subr.bf16.mxu0 0
  %1052 = vmatpush2.bf16.msra.mxu0 0
  %1053 = vmatprep.subr.bf16.mxu0 0
  %1054 = vmatpush2.bf16.msra.mxu0 0
  %1055 = vmatprep.subr.bf16.mxu0 0
  %1056 = vmatpush2.bf16.msra.mxu0 0
  %1057 = vmatprep.mubr.bf16.mxu0 0
  %1058 = vmatmul.mubr.bf16.gmra.mxu0 %v1020
  %v1059 = vpop.f32.mrf.mxu0
  %v1060 = vadd.f32 0.0, %v1059
  %v1061 = vpop.f32.mrf.mxu0
  %v1062 = vpop.f32.mrf.mxu0
  %v1063 = vpop.f32.mrf.mxu0
  %1064 = vdwg.mxu0
  %v1066 = vrot.slane %v204, 4
  %v1068 = vsel %vm213, %v920, 0
  %v1071 = vsel %vm457, %v1066, 0
  %1073 = vmatprep.subr.bf16.mxu0 0
  %1074 = vmatpush1.bf16.msra.mxu0 0
  %1075 = vmatprep.subr.bf16.mxu0 0
  %1076 = vmatpush1.bf16.msra.mxu0 0
  %1077 = vmatprep.subr.bf16.mxu0 0
  %1078 = vmatpush1.bf16.msra.mxu0 0
  %1079 = vmatprep.subr.bf16.mxu0 0
  %1080 = vmatpush1.bf16.msra.mxu0 0
  %1081 = vmatprep.subr.bf16.mxu0 0
  %1082 = vmatpush1.bf16.msra.mxu0 0
  %1083 = vmatprep.subr.bf16.mxu0 0
  %1084 = vmatpush1.bf16.msra.mxu0 0
  %1085 = vmatprep.subr.bf16.mxu0 0
  %1086 = vmatpush1.bf16.msra.mxu0 0
  %1087 = vmatprep.subr.bf16.mxu0 0
  %1088 = vmatpush1.bf16.msra.mxu0 %v1071
  %1089 = vmatprep.subr.bf16.mxu0 0
  %1090 = vmatpush2.bf16.msra.mxu0 0
  %1091 = vmatprep.subr.bf16.mxu0 0
  %1092 = vmatpush2.bf16.msra.mxu0 0
  %1093 = vmatprep.subr.bf16.mxu0 0
  %1094 = vmatpush2.bf16.msra.mxu0 0
  %1095 = vmatprep.subr.bf16.mxu0 0
  %1096 = vmatpush2.bf16.msra.mxu0 0
  %1097 = vmatprep.subr.bf16.mxu0 0
  %1098 = vmatpush2.bf16.msra.mxu0 0
  %1099 = vmatprep.subr.bf16.mxu0 0
  %1100 = vmatpush2.bf16.msra.mxu0 0
  %1101 = vmatprep.subr.bf16.mxu0 0
  %1102 = vmatpush2.bf16.msra.mxu0 0
  %1103 = vmatprep.subr.bf16.mxu0 0
  %1104 = vmatpush2.bf16.msra.mxu0 0
  %1105 = vmatprep.mubr.bf16.mxu0 0
  %1106 = vmatmul.mubr.bf16.gmra.mxu0 %v1068
  %v1107 = vpop.f32.mrf.mxu0
  %v1108 = vadd.f32 0.0, %v1107
  %v1109 = vpop.f32.mrf.mxu0
  %v1110 = vpop.f32.mrf.mxu0
  %v1111 = vpop.f32.mrf.mxu0
  %1112 = vdwg.mxu0
  %1114 = vrot.lane.b32.xlu0 %v1012, 8
  %v1115 = vpop.permute.xlu0 %1114
  %1118 = vrot.lane.b32.xlu0 %v1060, 16
  %v1119 = vpop.permute.xlu0 %1118
  %1122 = vrot.lane.b32.xlu0 %v1108, 24
  %v1123 = vpop.permute.xlu0 %1122
  %v1125 = vsel %vm213, %v964, %v1115
  %v1126 = vsel %vm652, %v1125, %v1119
  %v1127 = vsel %vm654, %v1126, %v1123
  %v1128 = vpack.c.bf16 %v1127, %v655
  %v1129 = vld [vmem:[%s4] sm:$0xf]
  %v1130 = vld [vmem:[%s4 + $0x4] sm:$0xf]
  %v1131 = vld [vmem:[%s4 + $0x8] sm:$0xf]
  %v1132 = vld [vmem:[%s4 + $0xc] sm:$0xf]
  %v1137 = vunpack.c.l.b16 %v1129
  %v1138 = vunpack.c.l.b16 %v1130
  %v1139 = vunpack.c.l.b16 %v1131
  %v1140 = vunpack.c.l.b16 %v1132
  %v1141 = vpack.c.b16 %v1138, %v1137
  %v1142 = vpack.c.b16 %v1140, %v1139
  %v1146 = vsel %vm39, %v1128, 0
  %1148 = vmatprep.subr.bf16.mxu0 0
  %1149 = vmatpush1.bf16.msra.mxu0 0
  %1150 = vmatprep.subr.bf16.mxu0 0
  %1151 = vmatpush1.bf16.msra.mxu0 0
  %1152 = vmatprep.subr.bf16.mxu0 0
  %1153 = vmatpush1.bf16.msra.mxu0 0
  %1154 = vmatprep.subr.bf16.mxu0 0
  %1155 = vmatpush1.bf16.msra.mxu0 0
  %1156 = vmatprep.subr.bf16.mxu0 0
  %1157 = vmatpush1.bf16.msra.mxu0 0
  %1158 = vmatprep.subr.bf16.mxu0 0
  %1159 = vmatpush1.bf16.msra.mxu0 0
  %1160 = vmatprep.subr.bf16.mxu0 0
  %1161 = vmatpush1.bf16.msra.mxu0 %v1142
  %1162 = vmatprep.subr.bf16.mxu0 0
  %1163 = vmatpush1.bf16.msra.mxu0 %v1141
  %1164 = vmatprep.subr.bf16.mxu0 0
  %1165 = vmatpush2.bf16.msra.mxu0 0
  %1166 = vmatprep.subr.bf16.mxu0 0
  %1167 = vmatpush2.bf16.msra.mxu0 0
  %1168 = vmatprep.subr.bf16.mxu0 0
  %1169 = vmatpush2.bf16.msra.mxu0 0
  %1170 = vmatprep.subr.bf16.mxu0 0
  %1171 = vmatpush2.bf16.msra.mxu0 0
  %1172 = vmatprep.subr.bf16.mxu0 0
  %1173 = vmatpush2.bf16.msra.mxu0 0
  %1174 = vmatprep.subr.bf16.mxu0 0
  %1175 = vmatpush2.bf16.msra.mxu0 0
  %1176 = vmatprep.subr.bf16.mxu0 0
  %1177 = vmatpush2.bf16.msra.mxu0 0
  %1178 = vmatprep.subr.bf16.mxu0 0
  %1179 = vmatpush2.bf16.msra.mxu0 0
  %1180 = vmatprep.mubr.bf16.mxu0 0
  %1181 = vmatmul.mubr.bf16.gmra.mxu0 %v1146
  %v1182 = vpop.f32.mrf.mxu0
  %v1183 = vadd.f32 0.0, %v1182
  %v1184 = vpop.f32.mrf.mxu0
  %v1185 = vpop.f32.mrf.mxu0
  %v1186 = vadd.f32 0.0, %v1185
  %v1187 = vpop.f32.mrf.mxu0
  %1188 = vdwg.mxu0
  %v1189 = vadd.f32 %v35, %v1183
  %v1190 = vadd.f32 %v36, %v1186
  %v1191 = vmul.f32 %v1189, %v1189
  %v1192 = vmul.f32 %v1190, %v1190
  %v1193 = vsel %vm39, %v1191, 0.0
  %1194 = vadd.xlane.f32.xlu0 %v1193
  %v1195 = vpop.xlane.xlu0 %1194
  %v1196 = vsel %vm39, %v1192, 0.0
  %1197 = vadd.xlane.f32.xlu0 %v1196
  %v1198 = vpop.xlane.xlu0 %1197
  %v1199 = vmul.f32 %v1195, %v46
  %v1200 = vmul.f32 %v1198, %v46
  %v1201 = vadd.f32 %v1199, 1e-06
  %v1202 = vadd.f32 %v1200, 1e-06
  %v1203 = vrsqrt.pop %v1201
  %v1204 = vrsqrt.pop %v1202
  %v1205 = vmul.f32 %v1189, %v1203
  %v1206 = vmul.f32 %v1190, %v1204
  %v1207 = vld [vmem:[%s5] sm:$0x1]
  %v1209 = vlaneseq
  %v1210 = vshrl.u32 %v1209, 7
  %v1211 = vsub.s32 0, %v1210
  %v1212 = vrot.slane %v1207, %v1211
  %v1214 = vmul.f32 %v1205, %v1212
  %v1215 = vmul.f32 %v1206, %v1212
  %v1216 = vpack.c.bf16 %v1215, %v1214
  %v1217 = vld [vmem:[%s6] sm:$0xf]
  %v1218 = vld [vmem:[%s6 + $0x4] sm:$0xf]
  %v1219 = vld [vmem:[%s6 + $0x8] sm:$0xf]
  %v1220 = vld [vmem:[%s6 + $0xc] sm:$0xf]
  %v1225 = vunpack.c.l.b16 %v1217
  %v1226 = vunpack.c.l.b16 %v1218
  %v1227 = vunpack.c.l.b16 %v1219
  %v1228 = vunpack.c.l.b16 %v1220
  %v1229 = vpack.c.b16 %v1226, %v1225
  %v1230 = vpack.c.b16 %v1228, %v1227
  %v1234 = vsel %vm39, %v1216, 0
  %1236 = vmatprep.subr.bf16.mxu0 0
  %1237 = vmatpush1.bf16.msra.mxu0 0
  %1238 = vmatprep.subr.bf16.mxu0 0
  %1239 = vmatpush1.bf16.msra.mxu0 0
  %1240 = vmatprep.subr.bf16.mxu0 0
  %1241 = vmatpush1.bf16.msra.mxu0 0
  %1242 = vmatprep.subr.bf16.mxu0 0
  %1243 = vmatpush1.bf16.msra.mxu0 0
  %1244 = vmatprep.subr.bf16.mxu0 0
  %1245 = vmatpush1.bf16.msra.mxu0 0
  %1246 = vmatprep.subr.bf16.mxu0 0
  %1247 = vmatpush1.bf16.msra.mxu0 0
  %1248 = vmatprep.subr.bf16.mxu0 0
  %1249 = vmatpush1.bf16.msra.mxu0 %v1230
  %1250 = vmatprep.subr.bf16.mxu0 0
  %1251 = vmatpush1.bf16.msra.mxu0 %v1229
  %1252 = vmatprep.subr.bf16.mxu0 0
  %1253 = vmatpush2.bf16.msra.mxu0 0
  %1254 = vmatprep.subr.bf16.mxu0 0
  %1255 = vmatpush2.bf16.msra.mxu0 0
  %1256 = vmatprep.subr.bf16.mxu0 0
  %1257 = vmatpush2.bf16.msra.mxu0 0
  %1258 = vmatprep.subr.bf16.mxu0 0
  %1259 = vmatpush2.bf16.msra.mxu0 0
  %1260 = vmatprep.subr.bf16.mxu0 0
  %1261 = vmatpush2.bf16.msra.mxu0 0
  %1262 = vmatprep.subr.bf16.mxu0 0
  %1263 = vmatpush2.bf16.msra.mxu0 0
  %1264 = vmatprep.subr.bf16.mxu0 0
  %1265 = vmatpush2.bf16.msra.mxu0 0
  %1266 = vmatprep.subr.bf16.mxu0 0
  %1267 = vmatpush2.bf16.msra.mxu0 0
  %1268 = vmatprep.mubr.bf16.mxu0 0
  %1269 = vmatmul.mubr.bf16.gmra.mxu0 %v1234
  %v1270 = vpop.f32.mrf.mxu0
  %v1271 = vadd.f32 0.0, %v1270
  %v1272 = vpop.f32.mrf.mxu0
  %v1273 = vpop.f32.mrf.mxu0
  %v1274 = vadd.f32 0.0, %v1273
  %v1275 = vpop.f32.mrf.mxu0
  %1276 = vdwg.mxu0
  %v1277 = vmul.f32 %v1271, %v1271
  %v1278 = vmul.f32 %v1274, %v1274
  %v1279 = vmul.f32 %v1271, %v1277
  %v1280 = vmul.f32 %v1274, %v1278
  %v1281 = vmul.f32 %v1279, 0.044715
  %v1282 = vmul.f32 %v1280, 0.044715
  %v1283 = vadd.f32 %v1271, %v1281
  %v1284 = vadd.f32 %v1274, %v1282
  %v1285 = vmul.f32 %v1283, 0.7978846
  %v1286 = vmul.f32 %v1284, 0.7978846
  %v1287 = vtanh.pop %v1285
  %v1288 = vtanh.pop %v1286
  %v1289 = vadd.f32 %v1287, 1.0
  %v1290 = vadd.f32 %v1288, 1.0
  %v1291 = vmul.f32 %v1289, 0.5
  %v1292 = vmul.f32 %v1290, 0.5
  %v1293 = vmul.f32 %v1271, %v1291
  %v1294 = vmul.f32 %v1274, %v1292
  %v1295 = vld [vmem:[%s7] sm:$0xf]
  %v1296 = vld [vmem:[%s7 + $0x4] sm:$0xf]
  %v1297 = vld [vmem:[%s7 + $0x8] sm:$0xf]
  %v1298 = vld [vmem:[%s7 + $0xc] sm:$0xf]
  %v1303 = vunpack.c.l.b16 %v1295
  %v1304 = vunpack.c.l.b16 %v1296
  %v1305 = vunpack.c.l.b16 %v1297
  %v1306 = vunpack.c.l.b16 %v1298
  %v1307 = vpack.c.b16 %v1304, %v1303
  %v1308 = vpack.c.b16 %v1306, %v1305
  %1311 = vmatprep.subr.bf16.mxu0 0
  %1312 = vmatpush1.bf16.msra.mxu0 0
  %1313 = vmatprep.subr.bf16.mxu0 0
  %1314 = vmatpush1.bf16.msra.mxu0 0
  %1315 = vmatprep.subr.bf16.mxu0 0
  %1316 = vmatpush1.bf16.msra.mxu0 0
  %1317 = vmatprep.subr.bf16.mxu0 0
  %1318 = vmatpush1.bf16.msra.mxu0 0
  %1319 = vmatprep.subr.bf16.mxu0 0
  %1320 = vmatpush1.bf16.msra.mxu0 0
  %1321 = vmatprep.subr.bf16.mxu0 0
  %1322 = vmatpush1.bf16.msra.mxu0 0
  %1323 = vmatprep.subr.bf16.mxu0 0
  %1324 = vmatpush1.bf16.msra.mxu0 %v1308
  %1325 = vmatprep.subr.bf16.mxu0 0
  %1326 = vmatpush1.bf16.msra.mxu0 %v1307
  %1327 = vmatprep.subr.bf16.mxu0 0
  %1328 = vmatpush2.bf16.msra.mxu0 0
  %1329 = vmatprep.subr.bf16.mxu0 0
  %1330 = vmatpush2.bf16.msra.mxu0 0
  %1331 = vmatprep.subr.bf16.mxu0 0
  %1332 = vmatpush2.bf16.msra.mxu0 0
  %1333 = vmatprep.subr.bf16.mxu0 0
  %1334 = vmatpush2.bf16.msra.mxu0 0
  %1335 = vmatprep.subr.bf16.mxu0 0
  %1336 = vmatpush2.bf16.msra.mxu0 0
  %1337 = vmatprep.subr.bf16.mxu0 0
  %1338 = vmatpush2.bf16.msra.mxu0 0
  %1339 = vmatprep.subr.bf16.mxu0 0
  %1340 = vmatpush2.bf16.msra.mxu0 0
  %1341 = vmatprep.subr.bf16.mxu0 0
  %1342 = vmatpush2.bf16.msra.mxu0 0
  %1343 = vmatprep.mubr.bf16.mxu0 0
  %1344 = vmatmul.mubr.bf16.gmra.mxu0 %v1234
  %v1345 = vpop.f32.mrf.mxu0
  %v1346 = vadd.f32 0.0, %v1345
  %v1347 = vpop.f32.mrf.mxu0
  %v1348 = vpop.f32.mrf.mxu0
  %v1349 = vadd.f32 0.0, %v1348
  %v1350 = vpop.f32.mrf.mxu0
  %1351 = vdwg.mxu0
  %v1352 = vmul.f32 %v1293, %v1346
  %v1353 = vmul.f32 %v1294, %v1349
  %v1354 = vpack.c.bf16 %v1353, %v1352
  %v1355 = vld [vmem:[%s8] sm:$0xf]
  %v1356 = vld [vmem:[%s8 + $0x4] sm:$0xf]
  %v1357 = vld [vmem:[%s8 + $0x8] sm:$0xf]
  %v1358 = vld [vmem:[%s8 + $0xc] sm:$0xf]
  %v1359 = vld [vmem:[%s8 + $0x10] sm:$0xf]
  %v1360 = vld [vmem:[%s8 + $0x14] sm:$0xf]
  %v1361 = vld [vmem:[%s8 + $0x18] sm:$0xf]
  %v1362 = vld [vmem:[%s8 + $0x1c] sm:$0xf]
  %v1371 = vunpack.c.l.b16 %v1355
  %v1372 = vunpack.c.l.b16 %v1356
  %v1373 = vunpack.c.l.b16 %v1357
  %v1374 = vunpack.c.l.b16 %v1358
  %v1375 = vunpack.c.l.b16 %v1359
  %v1376 = vunpack.c.l.b16 %v1360
  %v1377 = vunpack.c.l.b16 %v1361
  %v1378 = vunpack.c.l.b16 %v1362
  %v1379 = vpack.c.b16 %v1372, %v1371
  %v1380 = vpack.c.b16 %v1374, %v1373
  %v1381 = vpack.c.b16 %v1376, %v1375
  %v1382 = vpack.c.b16 %v1378, %v1377
  %vm1387 = vcmask 523264
  %v1389 = vsel %vm1387, %v1354, 0
  %1391 = vmatprep.subr.bf16.mxu0 0
  %1392 = vmatpush1.bf16.msra.mxu0 0
  %1393 = vmatprep.subr.bf16.mxu0 0
  %1394 = vmatpush1.bf16.msra.mxu0 0
  %1395 = vmatprep.subr.bf16.mxu0 0
  %1396 = vmatpush1.bf16.msra.mxu0 0
  %1397 = vmatprep.subr.bf16.mxu0 0
  %1398 = vmatpush1.bf16.msra.mxu0 0
  %1399 = vmatprep.subr.bf16.mxu0 0
  %1400 = vmatpush1.bf16.msra.mxu0 %v1382
  %1401 = vmatprep.subr.bf16.mxu0 0
  %1402 = vmatpush1.bf16.msra.mxu0 %v1381
  %1403 = vmatprep.subr.bf16.mxu0 0
  %1404 = vmatpush1.bf16.msra.mxu0 %v1380
  %1405 = vmatprep.subr.bf16.mxu0 0
  %1406 = vmatpush1.bf16.msra.mxu0 %v1379
  %1407 = vmatprep.subr.bf16.mxu0 0
  %1408 = vmatpush2.bf16.msra.mxu0 0
  %1409 = vmatprep.subr.bf16.mxu0 0
  %1410 = vmatpush2.bf16.msra.mxu0 0
  %1411 = vmatprep.subr.bf16.mxu0 0
  %1412 = vmatpush2.bf16.msra.mxu0 0
  %1413 = vmatprep.subr.bf16.mxu0 0
  %1414 = vmatpush2.bf16.msra.mxu0 0
  %1415 = vmatprep.subr.bf16.mxu0 0
  %1416 = vmatpush2.bf16.msra.mxu0 0
  %1417 = vmatprep.subr.bf16.mxu0 0
  %1418 = vmatpush2.bf16.msra.mxu0 0
  %1419 = vmatprep.subr.bf16.mxu0 0
  %1420 = vmatpush2.bf16.msra.mxu0 0
  %1421 = vmatprep.subr.bf16.mxu0 0
  %1422 = vmatpush2.bf16.msra.mxu0 0
  %1423 = vmatprep.mubr.bf16.mxu0 0
  %1424 = vmatmul.mubr.bf16.gmra.mxu0 %v1389
  %v1425 = vpop.f32.mrf.mxu0
  %v1426 = vadd.f32 0.0, %v1425
  %v1427 = vpop.f32.mrf.mxu0
  %v1428 = vpop.f32.mrf.mxu0
  %v1429 = vadd.f32 0.0, %v1428
  %v1430 = vpop.f32.mrf.mxu0
  %1431 = vdwg.mxu0
  %v1432 = vadd.f32 %v1189, %v1426
  %v1433 = vadd.f32 %v1190, %v1429
  %v1434 = vpack.c.bf16 %v1433, %v1432
  %v1436 = vunpack.c.l.b16 %v1434
  %v1437 = vunpack.c.h.b16 %v1434
  %v1438 = vpack.c.b16 %v1436, %v1436
  %v1439 = vpack.c.b16 %v1437, %v1437
  %vm1442 = vcmask 257024
  %1443 = vst.msk [vmem:[%s9] sm:$0xf] %vm1442, %v1438
  %1444 = vst.msk [vmem:[%s9 + $0x4] sm:$0xf] %vm1442, %v1439
  // Predicated region
  $region38: #{cpm_live_forward.3} parent=0 // pred_check
    _
  $region39: #{cpm_live_forward.3} parent=0 // pred_check_branch
    %1446 = sbr.rel (0) target = $region41
  $region40: #{cpm_live_forward.3} parent=0 // pred_region
    _
  $region41: #{cpm_live_forward.3} parent=0 // pred_fallthru
    _
  // Predicated region
  $region42: #{cpm_live_forward.3} parent=0 // pred_check
    _
  $region43: #{cpm_live_forward.3} parent=0 // pred_check_branch
    %1448 = sbr.rel (0) target = $region45
  $region44: #{cpm_live_forward.3} parent=0 // pred_region
    _
  $region45: #{cpm_live_forward.3} parent=0 // pred_fallthru
    _

</llo_original>
